<compile_context>
chip_gen: v5e
topology: v5e:2x2
jax: 0.10.0
libtpu: 0.0.40
codegen_flags: <defaults>
</compile_context>

<pallas_src>
import functools

import jax
import jax.numpy as jnp
from jax.experimental import pallas as pl
from jax.experimental.pallas import tpu as pltpu


def dsd_fc_kernel(x_ref, w1_ref, b1_ref, w2_ref, b2_ref, w3_ref, b3_ref,
                  out_ref, acc_ref):
    """Grid: (row tiles of M = batch*Ns, K chunks of the first Linear)."""
    k = pl.program_id(1)

    @pl.when(k == 0)
    def _():
        acc_ref[...] = jnp.zeros_like(acc_ref)

    # First Linear (input_size -> reduced): cast the f32 x tile to bf16 on the
    # VPU (free slot, kernel is HBM-bound) and accumulate in f32 on the MXU.
    acc_ref[...] += jnp.dot(x_ref[...].astype(jnp.bfloat16), w1_ref[...],
                            preferred_element_type=jnp.float32)

    @pl.when(k == pl.num_programs(1) - 1)
    def _():
        # ReLU(x @ W1 + b1); Dropout(0.2) is identity in eval/inference mode.
        h1 = jnp.maximum(acc_ref[...] + b1_ref[...], 0.0)
        # Second Linear (reduced -> hidden) + ReLU.
        h2 = jnp.dot(h1, w2_ref[...],
                     preferred_element_type=jnp.float32) + b2_ref[...]
        h2 = jnp.maximum(h2, 0.0)
        # Third Linear (hidden -> 1) as a VPU reduction (avoids an N=1 MXU pass).
        out_ref[...] = (jnp.sum(h2 * w3_ref[...], axis=-1, keepdims=True)
                        + b3_ref[...])


def _pick_row_tile(m, target=256):
    """Largest row tile <= target that evenly divides M (or M itself)."""
    if m <= target:
        return m
    for t in (target, 128, 64, 32, 16, 8):
        if m % t == 0:
            return t
    return m  # fall back to a single row block


def _pick_k_tile(k, target=4096):
    """Prefer a K tile that evenly divides K (avoids a padding copy of x)."""
    if k <= target:
        return k
    for t in (target, 2048, 1024, 512, 256, 128):
        if k % t == 0:
            return t
    return target  # no nice divisor -> wrapper will zero-pad K


@functools.partial(jax.jit, static_argnames=("tk", "tm"))
def dsd_fc_forward(x, w1, b1, w2, b2, w3, b3, tk=4096, tm=256):
    """x: (batch, Ns, input_size) float32 -> (batch,) float32."""
    B, Ns, K = x.shape
    M = B * Ns
    reduced = w1.shape[1]
    hidden = w2.shape[1]

    # x stays f32 (read once by the kernel; casting in the wrapper would add a
    # full extra HBM pass).  W1 is bf16 since it is re-read once per M tile.
    xf = x.reshape(M, K)
    w1c = w1.astype(jnp.bfloat16)

    # Tile K; zero-pad only if no clean divisor exists (zeros don't change x@W1).
    tk = _pick_k_tile(K, tk)
    if K % tk != 0:
        pad = tk - (K % tk)
        xf = jnp.pad(xf, ((0, 0), (0, pad)))
        w1c = jnp.pad(w1c, ((0, pad), (0, 0)))
        K = K + pad

    tm = _pick_row_tile(M, tm)

    b1r = b1.reshape(1, reduced)
    b2r = b2.reshape(1, hidden)
    w3r = w3.reshape(1, hidden)     # row vector for the VPU reduction
    b3r = b3.reshape(1, 1)

    grid = (M // tm, K // tk)

    cost = pl.CostEstimate(
        flops=2 * M * (K * reduced + reduced * hidden + hidden),
        transcendentals=0,
        bytes_accessed=(xf.size * 4                       # x streamed as f32
                        + (M // tm) * w1c.size * 2        # bf16 W1 per M tile
                        + w2.size * 4
                        + (reduced + 2 * hidden + 1) * 4
                        + M * 4),
    )

    scores = pl.pallas_call(
        dsd_fc_kernel,
        out_shape=jax.ShapeDtypeStruct((M, 1), jnp.float32),
        grid_spec=pltpu.PrefetchScalarGridSpec(
            num_scalar_prefetch=0,
            grid=grid,
            in_specs=[
                pl.BlockSpec((tm, tk), lambda m, k: (m, k)),           # x chunk (f32)
                pl.BlockSpec((tk, reduced), lambda m, k: (k, 0)),      # W1 chunk (bf16)
                pl.BlockSpec((1, reduced), lambda m, k: (0, 0)),       # b1
                pl.BlockSpec((reduced, hidden), lambda m, k: (0, 0)),  # W2
                pl.BlockSpec((1, hidden), lambda m, k: (0, 0)),        # b2
                pl.BlockSpec((1, hidden), lambda m, k: (0, 0)),        # w3 row
                pl.BlockSpec((1, 1), lambda m, k: (0, 0)),             # b3
            ],
            out_specs=pl.BlockSpec((tm, 1), lambda m, k: (m, 0)),
            scratch_shapes=[pltpu.VMEM((tm, reduced), jnp.float32)],
        ),
        compiler_params=pltpu.CompilerParams(
            dimension_semantics=("parallel", "arbitrary")),
        cost_estimate=cost,
    )(xf, w1c, b1r, w2, b2r, w3r, b3r)

    # Per-group mean over Ns: O(B*Ns) work, done in the wrapper (no dense
    # averaging-matrix matmul in the kernel).
    return jnp.mean(scores.reshape(B, Ns), axis=1)


def _init_params(key, input_size, hidden_size):
    """Deterministic parameter init matching DSD_FC.__init__ shapes."""
    if hidden_size < input_size // 16 // 16:
        reduced_size = 512
    else:
        reduced_size = 128

    k1, k2, k3, k4, k5, k6 = jax.random.split(key, 6)

    def uni(k, shape, fan_in):
        bound = 1.0 / jnp.sqrt(fan_in)
        return jax.random.uniform(k, shape, jnp.float32, -bound, bound)

    # Stored as (in, out) for row-major x @ W in the kernel.
    w1 = uni(k1, (input_size, reduced_size), input_size)
    b1 = uni(k2, (reduced_size,), input_size)
    w2 = uni(k3, (reduced_size, hidden_size), reduced_size)
    b2 = uni(k4, (hidden_size,), reduced_size)
    w3 = uni(k5, (hidden_size, 1), hidden_size)
    b3 = uni(k6, (1,), hidden_size)
    return w1, b1, w2, b2, w3, b3


def _reference(x, w1, b1, w2, b2, w3, b3):
    """Pure f32 JAX reference (Dropout identity in eval mode)."""
    B, Ns, K = x.shape
    xf = x.reshape(B * Ns, K)
    h1 = jnp.maximum(xf @ w1 + b1, 0.0)
    h2 = jnp.maximum(h1 @ w2 + b2, 0.0)
    s = (h2 @ w3 + b3).reshape(B, Ns)
    return jnp.mean(s, axis=1)


if __name__ == "__main__":
    batch, Ns = 2, 8
    input_size, hidden_size = 4096 * 2, 32   # module defaults -> reduced_size = 128

    key = jax.random.PRNGKey(0)
    kx, kp = jax.random.split(key)
    x = jax.random.normal(kx, (batch, Ns, input_size), dtype=jnp.float32)
    params = _init_params(kp, input_size, hidden_size)

    out = dsd_fc_forward(x, *params)
    out = jax.block_until_ready(out)

    ref = _reference(x, *params)
    assert out.shape == (batch,)
    # Tolerance accounts for the bf16 first matmul (f32 accumulation);
    # observed error is ~1e-3 absolute, well inside this bound.
    assert jnp.allclose(out, ref, atol=2e-2, rtol=2e-2), (out, ref)

    print("KERNEL_OK")
</pallas_src>

<mosaic_0001>
module attributes {stable_mosaic.version = 11 : i64} {
  func.func @dsd_fc_kernel(%arg0: i32, %arg1: i32, %arg2: memref<16x4096xf32, #tpu.memory_space<vmem>>, %arg3: memref<4096x128xbf16, #tpu.memory_space<vmem>>, %arg4: memref<1x128xf32, #tpu.memory_space<vmem>>, %arg5: memref<128x32xf32, #tpu.memory_space<vmem>>, %arg6: memref<1x32xf32, #tpu.memory_space<vmem>>, %arg7: memref<1x32xf32, #tpu.memory_space<vmem>>, %arg8: memref<1x1xf32, #tpu.memory_space<vmem>>, %arg9: memref<16x1xf32, #tpu.memory_space<vmem>>, %arg10: memref<16x128xf32, #tpu.memory_space<vmem>>) attributes {dimension_semantics = [#tpu.dimension_semantics<parallel>, #tpu.dimension_semantics<arbitrary>], iteration_bounds = array<i64: 1, 2>, scalar_prefetch = 0 : i64, scratch_operands = 1 : i64, tpu.core_type = #tpu.core_type<tc>, window_params = [{transform_indices = @transform_0, window_bounds = array<i64: 16, 4096>}, {transform_indices = @transform_1, window_bounds = array<i64: 4096, 128>}, {pipeline_mode = #tpu.pipeline_mode<synchronous>, transform_indices = @transform_2, window_bounds = array<i64: 1, 128>}, {pipeline_mode = #tpu.pipeline_mode<synchronous>, transform_indices = @transform_3, window_bounds = array<i64: 128, 32>}, {pipeline_mode = #tpu.pipeline_mode<synchronous>, transform_indices = @transform_4, window_bounds = array<i64: 1, 32>}, {pipeline_mode = #tpu.pipeline_mode<synchronous>, transform_indices = @transform_5, window_bounds = array<i64: 1, 32>}, {pipeline_mode = #tpu.pipeline_mode<synchronous>, transform_indices = @transform_6, window_bounds = array<i64: 1, 1>}, {transform_indices = @transform_7, window_bounds = array<i64: 16, 1>}]} {
    %c0_i32 = arith.constant 0 : i32
    %0 = arith.cmpi eq, %arg1, %c0_i32 : i32
    %1 = arith.extui %0 : i1 to i32
    %c0_i32_0 = arith.constant 0 : i32
    %2 = arith.cmpi ne, %1, %c0_i32_0 : i32
    scf.if %2 {
      %cst_9 = arith.constant 0.000000e+00 : f32
      %13 = vector.broadcast %cst_9 : f32 to vector<16x128xf32>
      %c0_10 = arith.constant 0 : index
      %c0_11 = arith.constant 0 : index
      %14 = vector.load %arg10[%c0_10, %c0_11] : memref<16x128xf32, #tpu.memory_space<vmem>>, vector<16x128xf32>
      tpu.vector_store %arg10[%c0_10, %c0_11], %13 {strides = array<i32>} : memref<16x128xf32, #tpu.memory_space<vmem>>, vector<16x128xf32>,
    } else {
    }
    %c0 = arith.constant 0 : index
    %c0_1 = arith.constant 0 : index
    %3 = vector.load %arg10[%c0, %c0_1] : memref<16x128xf32, #tpu.memory_space<vmem>>, vector<16x128xf32>
    %c0_2 = arith.constant 0 : index
    %c0_3 = arith.constant 0 : index
    %4 = vector.load %arg2[%c0_2, %c0_3] : memref<16x4096xf32, #tpu.memory_space<vmem>>, vector<16x4096xf32>
    %5 = arith.truncf %4 : vector<16x4096xf32> to vector<16x4096xbf16>
    %c0_4 = arith.constant 0 : index
    %c0_5 = arith.constant 0 : index
    %6 = vector.load %arg3[%c0_4, %c0_5] : memref<4096x128xbf16, #tpu.memory_space<vmem>>, vector<4096x128xbf16>
    %cst = arith.constant dense<0.000000e+00> : vector<16x128xf32>
    %7 = tpu.matmul %5, %6, %cst {dimension_numbers = #tpu.dot_dimension_numbers<[1], [0], [0], [1], [0, 0, 1, 1], [], []>} : vector<16x4096xbf16>, vector<4096x128xbf16>, vector<16x128xf32> -> vector<16x128xf32>
    %8 = arith.addf %3, %7 : vector<16x128xf32>
    %c0_6 = arith.constant 0 : index
    %c0_7 = arith.constant 0 : index
    %9 = vector.load %arg10[%c0_6, %c0_7] : memref<16x128xf32, #tpu.memory_space<vmem>>, vector<16x128xf32>
    tpu.vector_store %arg10[%c0_6, %c0_7], %8 {strides = array<i32>} : memref<16x128xf32, #tpu.memory_space<vmem>>, vector<16x128xf32>,
    %c1_i32 = arith.constant 1 : i32
    %10 = arith.cmpi eq, %arg1, %c1_i32 : i32
    %11 = arith.extui %10 : i1 to i32
    %c0_i32_8 = arith.constant 0 : i32
    %12 = arith.cmpi ne, %11, %c0_i32_8 : i32
    scf.if %12 {
      %c0_9 = arith.constant 0 : index
      %c0_10 = arith.constant 0 : index
      %13 = vector.load %arg10[%c0_9, %c0_10] : memref<16x128xf32, #tpu.memory_space<vmem>>, vector<16x128xf32>
      %c0_11 = arith.constant 0 : index
      %c0_12 = arith.constant 0 : index
      %14 = vector.load %arg4[%c0_11, %c0_12] : memref<1x128xf32, #tpu.memory_space<vmem>>, vector<1x128xf32>
      %15 = vector.broadcast %14 : vector<1x128xf32> to vector<16x128xf32>
      %16 = arith.addf %13, %15 : vector<16x128xf32>
      %cst_13 = arith.constant 0.000000e+00 : f32
      %17 = vector.broadcast %cst_13 : f32 to vector<16x128xf32>
      %18 = arith.maximumf %16, %17 : vector<16x128xf32>
      %c0_14 = arith.constant 0 : index
      %c0_15 = arith.constant 0 : index
      %19 = vector.load %arg5[%c0_14, %c0_15] : memref<128x32xf32, #tpu.memory_space<vmem>>, vector<128x32xf32>
      %cst_16 = arith.constant dense<0.000000e+00> : vector<16x32xf32>
      %20 = tpu.matmul %18, %19, %cst_16 {dimension_numbers = #tpu.dot_dimension_numbers<[1], [0], [0], [1], [0, 0, 1, 1], [], []>} : vector<16x128xf32>, vector<128x32xf32>, vector<16x32xf32> -> vector<16x32xf32>
      %c0_17 = arith.constant 0 : index
      %c0_18 = arith.constant 0 : index
      %21 = vector.load %arg6[%c0_17, %c0_18] : memref<1x32xf32, #tpu.memory_space<vmem>>, vector<1x32xf32>
      %22 = vector.broadcast %21 : vector<1x32xf32> to vector<16x32xf32>
      %23 = arith.addf %20, %22 : vector<16x32xf32>
      %cst_19 = arith.constant 0.000000e+00 : f32
      %24 = vector.broadcast %cst_19 : f32 to vector<16x32xf32>
      %25 = arith.maximumf %23, %24 : vector<16x32xf32>
      %c0_20 = arith.constant 0 : index
      %c0_21 = arith.constant 0 : index
      %26 = vector.load %arg7[%c0_20, %c0_21] : memref<1x32xf32, #tpu.memory_space<vmem>>, vector<1x32xf32>
      %27 = vector.broadcast %26 : vector<1x32xf32> to vector<16x32xf32>
      %28 = arith.mulf %25, %27 : vector<16x32xf32>
      %cst_22 = arith.constant dense<0.000000e+00> : vector<16xf32>
      %29 = vector.multi_reduction <add>, %28, %cst_22 [1] : vector<16x32xf32> to vector<16xf32>
      %30 = vector.shape_cast %29 : vector<16xf32> to vector<16x1xf32>
      %c0_23 = arith.constant 0 : index
      %c0_24 = arith.constant 0 : index
      %31 = vector.load %arg8[%c0_23, %c0_24] : memref<1x1xf32, #tpu.memory_space<vmem>>, vector<1x1xf32>
      %32 = vector.broadcast %31 : vector<1x1xf32> to vector<16x1xf32>
      %33 = arith.addf %30, %32 : vector<16x1xf32>
      %c0_25 = arith.constant 0 : index
      %c0_26 = arith.constant 0 : index
      %34 = vector.load %arg9[%c0_25, %c0_26] : memref<16x1xf32, #tpu.memory_space<vmem>>, vector<16x1xf32>
      tpu.vector_store %arg9[%c0_25, %c0_26], %33 {strides = array<i32>} : memref<16x1xf32, #tpu.memory_space<vmem>>, vector<16x1xf32>,
    } else {
    }
    return
  }
  func.func @transform_0(%arg0: i32, %arg1: i32) -> (i32, i32) {
    %c0_i32 = arith.constant 0 : i32
    return %arg0, %arg1 : i32, i32
  }
  func.func @transform_1(%arg0: i32, %arg1: i32) -> (i32, i32) {
    %c0_i32 = arith.constant 0 : i32
    %c0_i32_0 = arith.constant 0 : i32
    return %arg1, %c0_i32 : i32, i32
  }
  func.func @transform_2(%arg0: i32, %arg1: i32) -> (i32, i32) {
    %c0_i32 = arith.constant 0 : i32
    %c0_i32_0 = arith.constant 0 : i32
    %c0_i32_1 = arith.constant 0 : i32
    return %c0_i32, %c0_i32_0 : i32, i32
  }
  func.func @transform_3(%arg0: i32, %arg1: i32) -> (i32, i32) {
    %c0_i32 = arith.constant 0 : i32
    %c0_i32_0 = arith.constant 0 : i32
    %c0_i32_1 = arith.constant 0 : i32
    return %c0_i32, %c0_i32_0 : i32, i32
  }
  func.func @transform_4(%arg0: i32, %arg1: i32) -> (i32, i32) {
    %c0_i32 = arith.constant 0 : i32
    %c0_i32_0 = arith.constant 0 : i32
    %c0_i32_1 = arith.constant 0 : i32
    return %c0_i32, %c0_i32_0 : i32, i32
  }
  func.func @transform_5(%arg0: i32, %arg1: i32) -> (i32, i32) {
    %c0_i32 = arith.constant 0 : i32
    %c0_i32_0 = arith.constant 0 : i32
    %c0_i32_1 = arith.constant 0 : i32
    return %c0_i32, %c0_i32_0 : i32, i32
  }
  func.func @transform_6(%arg0: i32, %arg1: i32) -> (i32, i32) {
    %c0_i32 = arith.constant 0 : i32
    %c0_i32_0 = arith.constant 0 : i32
    %c0_i32_1 = arith.constant 0 : i32
    return %c0_i32, %c0_i32_0 : i32, i32
  }
  func.func @transform_7(%arg0: i32, %arg1: i32) -> (i32, i32) {
    %c0_i32 = arith.constant 0 : i32
    %c0_i32_0 = arith.constant 0 : i32
    return %arg0, %c0_i32 : i32, i32
  }
}

</mosaic_0001>

<llo_original>
// kernel: dsd_fc_forward.1
$region0: #{dsd_fc_forward.1}
  #allocation0 [shape = 'u32[]', space=smem, size = 0x4, offset = 0x4, fixed_abs, tag = 'smem constant byte address 0x4 - core index']
  #allocation1 [shape = 'u32[72,128]{1,0:T(1,128)}', space=vmem, size = 0x9000, scoped, tag = 'internal scratch']
  #allocation2 [shape = 'f32[16,128]{1,0:T(8,128)}', space=vmem, size = 0x2000, scoped, tag = 'scratch operand']
  #allocation3 [shape = 'f32[1,1]{1,0:T(1,128)S(1)}', space=vmem, size = 0x200, scoped, tag = 'scoped memory for dsd_fc_forward.1']
  %s0 = inlined_call_operand.vmem [shape: f32[16,8192], index: 0, kind: input, shape index: {}]
  %s1 = inlined_call_operand.vmem [shape: bf16[8192,128], index: 1, kind: input, shape index: {}]
  %s2 = inlined_call_operand.vmem [shape: f32[1,128], index: 2, kind: input, shape index: {}]
  %s3 = inlined_call_operand.vmem [shape: f32[128,32], index: 3, kind: input, shape index: {}]
  %s4 = inlined_call_operand.vmem [shape: f32[1,32], index: 4, kind: input, shape index: {}]
  %s5 = inlined_call_operand.vmem [shape: f32[1,32], index: 5, kind: input, shape index: {}]
  %s6 = inlined_call_operand.<no memory space> [shape: f32[1,1], index: 6, kind: input, shape index: {}]
  %s7 = inlined_call_operand.vmem [shape: f32[16,1], index: 7, kind: output, shape index: {}]
  %s8 = sld [smem:[#allocation0]]
  $region92: #{dsd_fc_forward.1} parent=0
    _
  %s10 = ssub.s32 1, %s8
  %s11 = scalar_select 0, %s10, %s8
  %v12 = vstv %s6
  %13 = vst [vmem:[#allocation3] sm:$0x1] %v12
  $region1: #{dsd_fc_forward.1} parent=0
    #allocation4 [shape = 'u8[524288]{0}', space=vmem, size = 0x80000, scoped, tag = 'input window, operand 0']
    loop: start=0, step=1, limit=4
    $region2: #{dsd_fc_forward.1} parent=1 // loop_pre_header
      _
    $region3: #{dsd_fc_forward.1} parent=1 // loop_header
      %s15 = sphi 0, %s19
      %p16 = scmp.ge.s32.totalorder %s15, 4
      %s22 = sphi 0, %s34
      %s23 = sphi 0, %s30
      %s24 = sphi 0, %s22
      %s25 = sphi 0, %s23
      %s26 = sphi 0, %s24
      %s27 = sphi 0, %s25
      %s39 = sphi 0, %s41
      %s42 = sphi 0, %s39
      %s43 = sphi 0, %s42
      %s59 = sphi 0, %s43
      %s65 = sphi 0, %s67
      %s68 = sphi 0, %s65
      %s69 = sphi 0, %s68
      %s85 = sphi 0, %s69
      %s89 = sphi 0, %s89
      %s91 = sphi 0, %s89
      %s92 = sphi 0, %s91
      %s106 = sphi 0, %s92
      %s110 = sphi 0, %s110
      %s112 = sphi 0, %s110
      %s113 = sphi 0, %s112
      %s127 = sphi 0, %s113
      %s131 = sphi 0, %s131
      %s133 = sphi 0, %s131
      %s134 = sphi 0, %s133
      %s148 = sphi 0, %s134
      %s152 = sphi 0, %s152
      %s154 = sphi 0, %s152
      %s155 = sphi 0, %s154
      %s169 = sphi 0, %s155
      %s173 = sphi 0, %s173
      %s175 = sphi 0, %s173
      %s176 = sphi 0, %s175
      %s190 = sphi 0, %s176
      %s196 = sphi 0, %s198
      %s199 = sphi 0, %s196
      %s200 = sphi 0, %s199
      %s216 = sphi 0, %s200
    $region4: #{dsd_fc_forward.1} parent=1 // loop_header_branch
      %18 = sbr.rel (%p16) target = $region8
    $region5: #{dsd_fc_forward.1} parent=1 // loop_body
      %s20 = ssub.s32 %s15, 1
      %s21 = ssub.s32 %s15, 2
      %s28 = sadd.s32 1, %s23
      %p29 = scmp.ge.s32.totalorder %s28, 2
      %s30 = scalar_select %p29, 0, %s28
      %s31 = sadd.s32 1, %s22
      %s32 = scalar_select %p29, %s31, %s22
      %p33 = scmp.ge.s32.totalorder %s32, 1
      %s34 = scalar_select %p33, 0, %s32
      %s35 = ssub.s32 %s22, %s34
      %s36 = ssub.s32 %s23, %s30
      %s37 = sor.u32 %s35, %s36
      %p38 = scmp.eq.s32.totalorder %s37, 0
      %s40 = sadd.s32 %s39, 1
      %s41 = scalar_select %p38, %s39, %s40
      %p44 = pneg %p38
      %p45 = scmp.eq.s32.totalorder %s15, 1
      %p46 = por %p44, %p45
      %p47 = scmp.ne.s32.totalorder %s39, %s42
      %p48 = scmp.eq.s32.totalorder %s15, 0
      %p49 = por %p47, %p48
      %p50 = scmp.ne.s32.totalorder %s39, %s42
      %p51 = scmp.eq.s32.totalorder %s20, 1
      %p52 = por %p50, %p51
      %p53 = scmp.ne.s32.totalorder %s42, %s43
      %p54 = scmp.eq.s32.totalorder %s20, 0
      %p55 = por %p53, %p54
      %p56 = scmp.ne.s32.totalorder %s42, %s43
      %p57 = scmp.eq.s32.totalorder %s21, 1
      %p58 = por %p56, %p57
      %p60 = scmp.ne.s32.totalorder %s43, %s59
      %p61 = scmp.eq.s32.totalorder %s21, 0
      %p62 = por %p60, %p61
      %s63 = ssub.s32 %s23, %s30
      %p64 = scmp.eq.s32.totalorder %s63, 0
      %s66 = sadd.s32 %s65, 1
      %s67 = scalar_select %p64, %s65, %s66
      %p70 = pneg %p64
      %p71 = scmp.eq.s32.totalorder %s15, 1
      %p72 = por %p70, %p71
      %p73 = scmp.ne.s32.totalorder %s65, %s68
      %p74 = scmp.eq.s32.totalorder %s15, 0
      %p75 = por %p73, %p74
      %p76 = scmp.ne.s32.totalorder %s65, %s68
      %p77 = scmp.eq.s32.totalorder %s20, 1
      %p78 = por %p76, %p77
      %p79 = scmp.ne.s32.totalorder %s68, %s69
      %p80 = scmp.eq.s32.totalorder %s20, 0
      %p81 = por %p79, %p80
      %p82 = scmp.ne.s32.totalorder %s68, %s69
      %p83 = scmp.eq.s32.totalorder %s21, 1
      %p84 = por %p82, %p83
      %p86 = scmp.ne.s32.totalorder %s69, %s85
      %p87 = scmp.eq.s32.totalorder %s21, 0
      %p88 = por %p86, %p87
      %s90 = sadd.s32 %s89, 1
      %p93 = scmp.eq.s32.totalorder %s15, 1
      %p94 = scmp.ne.s32.totalorder %s89, %s91
      %p95 = scmp.eq.s32.totalorder %s15, 0
      %p96 = por %p94, %p95
      %p97 = scmp.ne.s32.totalorder %s89, %s91
      %p98 = scmp.eq.s32.totalorder %s20, 1
      %p99 = por %p97, %p98
      %p100 = scmp.ne.s32.totalorder %s91, %s92
      %p101 = scmp.eq.s32.totalorder %s20, 0
      %p102 = por %p100, %p101
      %p103 = scmp.ne.s32.totalorder %s91, %s92
      %p104 = scmp.eq.s32.totalorder %s21, 1
      %p105 = por %p103, %p104
      %p107 = scmp.ne.s32.totalorder %s92, %s106
      %p108 = scmp.eq.s32.totalorder %s21, 0
      %p109 = por %p107, %p108
      %s111 = sadd.s32 %s110, 1
      %p114 = scmp.eq.s32.totalorder %s15, 1
      %p115 = scmp.ne.s32.totalorder %s110, %s112
      %p116 = scmp.eq.s32.totalorder %s15, 0
      %p117 = por %p115, %p116
      %p118 = scmp.ne.s32.totalorder %s110, %s112
      %p119 = scmp.eq.s32.totalorder %s20, 1
      %p120 = por %p118, %p119
      %p121 = scmp.ne.s32.totalorder %s112, %s113
      %p122 = scmp.eq.s32.totalorder %s20, 0
      %p123 = por %p121, %p122
      %p124 = scmp.ne.s32.totalorder %s112, %s113
      %p125 = scmp.eq.s32.totalorder %s21, 1
      %p126 = por %p124, %p125
      %p128 = scmp.ne.s32.totalorder %s113, %s127
      %p129 = scmp.eq.s32.totalorder %s21, 0
      %p130 = por %p128, %p129
      %s132 = sadd.s32 %s131, 1
      %p135 = scmp.eq.s32.totalorder %s15, 1
      %p136 = scmp.ne.s32.totalorder %s131, %s133
      %p137 = scmp.eq.s32.totalorder %s15, 0
      %p138 = por %p136, %p137
      %p139 = scmp.ne.s32.totalorder %s131, %s133
      %p140 = scmp.eq.s32.totalorder %s20, 1
      %p141 = por %p139, %p140
      %p142 = scmp.ne.s32.totalorder %s133, %s134
      %p143 = scmp.eq.s32.totalorder %s20, 0
      %p144 = por %p142, %p143
      %p145 = scmp.ne.s32.totalorder %s133, %s134
      %p146 = scmp.eq.s32.totalorder %s21, 1
      %p147 = por %p145, %p146
      %p149 = scmp.ne.s32.totalorder %s134, %s148
      %p150 = scmp.eq.s32.totalorder %s21, 0
      %p151 = por %p149, %p150
      %s153 = sadd.s32 %s152, 1
      %p156 = scmp.eq.s32.totalorder %s15, 1
      %p157 = scmp.ne.s32.totalorder %s152, %s154
      %p158 = scmp.eq.s32.totalorder %s15, 0
      %p159 = por %p157, %p158
      %p160 = scmp.ne.s32.totalorder %s152, %s154
      %p161 = scmp.eq.s32.totalorder %s20, 1
      %p162 = por %p160, %p161
      %p163 = scmp.ne.s32.totalorder %s154, %s155
      %p164 = scmp.eq.s32.totalorder %s20, 0
      %p165 = por %p163, %p164
      %p166 = scmp.ne.s32.totalorder %s154, %s155
      %p167 = scmp.eq.s32.totalorder %s21, 1
      %p168 = por %p166, %p167
      %p170 = scmp.ne.s32.totalorder %s155, %s169
      %p171 = scmp.eq.s32.totalorder %s21, 0
      %p172 = por %p170, %p171
      %s174 = sadd.s32 %s173, 1
      %p177 = scmp.eq.s32.totalorder %s15, 1
      %p178 = scmp.ne.s32.totalorder %s173, %s175
      %p179 = scmp.eq.s32.totalorder %s15, 0
      %p180 = por %p178, %p179
      %p181 = scmp.ne.s32.totalorder %s173, %s175
      %p182 = scmp.eq.s32.totalorder %s20, 1
      %p183 = por %p181, %p182
      %p184 = scmp.ne.s32.totalorder %s175, %s176
      %p185 = scmp.eq.s32.totalorder %s20, 0
      %p186 = por %p184, %p185
      %p187 = scmp.ne.s32.totalorder %s175, %s176
      %p188 = scmp.eq.s32.totalorder %s21, 1
      %p189 = por %p187, %p188
      %p191 = scmp.ne.s32.totalorder %s176, %s190
      %p192 = scmp.eq.s32.totalorder %s21, 0
      %p193 = por %p191, %p192
      %s194 = ssub.s32 %s22, %s34
      %p195 = scmp.eq.s32.totalorder %s194, 0
      %s197 = sadd.s32 %s196, 1
      %s198 = scalar_select %p195, %s196, %s197
      %p201 = pneg %p195
      %p202 = scmp.eq.s32.totalorder %s15, 1
      %p203 = por %p201, %p202
      %p204 = scmp.ne.s32.totalorder %s196, %s199
      %p205 = scmp.eq.s32.totalorder %s15, 0
      %p206 = por %p204, %p205
      %p207 = scmp.ne.s32.totalorder %s196, %s199
      %p208 = scmp.eq.s32.totalorder %s20, 1
      %p209 = por %p207, %p208
      %p210 = scmp.ne.s32.totalorder %s199, %s200
      %p211 = scmp.eq.s32.totalorder %s20, 0
      %p212 = por %p210, %p211
      %p213 = scmp.ne.s32.totalorder %s199, %s200
      %p214 = scmp.eq.s32.totalorder %s21, 1
      %p215 = por %p213, %p214
      %p217 = scmp.ne.s32.totalorder %s200, %s216
      %p218 = scmp.eq.s32.totalorder %s21, 0
      %p219 = por %p217, %p218
      %p220 = scmp.le.s32.totalorder 1, %s15
      %p221 = scmp.lt.s32.totalorder %s15, 3
      %p222 = pnand %p220, %p221
      %p223 = pneg %p222
      // Predicated region
      $region9: #{dsd_fc_forward.1} parent=5 // pred_check
        _
      $region10: #{dsd_fc_forward.1} parent=5 // pred_check_branch
        %225 = sbr.rel (%p222) target = $region12
      $region11: #{dsd_fc_forward.1} parent=5 // pred_region
        %s226 = ssub.s32 %s15, 1
        // Predicated region
        $region13: #{dsd_fc_forward.1} parent=11 // pred_check
          %p227 = pneg %p102
        $region14: #{dsd_fc_forward.1} parent=11 // pred_check_branch
          %229 = sbr.rel (%p227) target = $region16
        $region15: #{dsd_fc_forward.1} parent=11 // pred_region
          _
        $region16: #{dsd_fc_forward.1} parent=11 // pred_fallthru
          _
        // Predicated region
        $region17: #{dsd_fc_forward.1} parent=11 // pred_check
          %p230 = pneg %p123
        $region18: #{dsd_fc_forward.1} parent=11 // pred_check_branch
          %232 = sbr.rel (%p230) target = $region20
        $region19: #{dsd_fc_forward.1} parent=11 // pred_region
          _
        $region20: #{dsd_fc_forward.1} parent=11 // pred_fallthru
          _
        // Predicated region
        $region21: #{dsd_fc_forward.1} parent=11 // pred_check
          %p233 = pneg %p144
        $region22: #{dsd_fc_forward.1} parent=11 // pred_check_branch
          %235 = sbr.rel (%p233) target = $region24
        $region23: #{dsd_fc_forward.1} parent=11 // pred_region
          _
        $region24: #{dsd_fc_forward.1} parent=11 // pred_fallthru
          _
        // Predicated region
        $region25: #{dsd_fc_forward.1} parent=11 // pred_check
          %p236 = pneg %p165
        $region26: #{dsd_fc_forward.1} parent=11 // pred_check_branch
          %238 = sbr.rel (%p236) target = $region28
        $region27: #{dsd_fc_forward.1} parent=11 // pred_region
          _
        $region28: #{dsd_fc_forward.1} parent=11 // pred_fallthru
          _
        // Predicated region
        $region29: #{dsd_fc_forward.1} parent=11 // pred_check
          %p239 = pneg %p186
        $region30: #{dsd_fc_forward.1} parent=11 // pred_check_branch
          %241 = sbr.rel (%p239) target = $region32
        $region31: #{dsd_fc_forward.1} parent=11 // pred_region
          _
        $region32: #{dsd_fc_forward.1} parent=11 // pred_fallthru
          _
      $region12: #{dsd_fc_forward.1} parent=5 // pred_fallthru
        _
      %p242 = scmp.lt.s32.totalorder %s15, 2
      // Predicated region
      $region33: #{dsd_fc_forward.1} parent=5 // pred_check
        %p243 = pneg %p242
      $region34: #{dsd_fc_forward.1} parent=5 // pred_check_branch
        %245 = sbr.rel (%p243) target = $region36
      $region35: #{dsd_fc_forward.1} parent=5 // pred_region
        // Predicated region
        $region37: #{dsd_fc_forward.1} parent=35 // pred_check
          %p246 = pneg %p49
        $region38: #{dsd_fc_forward.1} parent=35 // pred_check_branch
          %248 = sbr.rel (%p246) target = $region40
        $region39: #{dsd_fc_forward.1} parent=35 // pred_region
          %s249 = sand.u32 %s39, 1
          %s250 = sand.u32 %s39, 1
          %s251 = smul.addr %s250, 512
          %s252 = scalar_lea.vmem [#allocation4], %s251
          %s253 = smul.u32 2, %s22
          %s254 = smul.u32 32, %s23
          %s255 = smul.addr %s253, 64
          %s256 = sadd.s32 %s254, %s255
          %s257 = smul.addr %s256, 8
          %s258 = scalar_lea.vmem %s0, %s257
          // Predicated region
          $region41: #{dsd_fc_forward.1} parent=39 // pred_check
            _
          $region42: #{dsd_fc_forward.1} parent=39 // pred_check_branch
            %260 = sbr.rel (0) target = $region44
          $region43: #{dsd_fc_forward.1} parent=39 // pred_region
            // Predicated region
            $region45: #{dsd_fc_forward.1} parent=43 // pred_check
              _
            $region46: #{dsd_fc_forward.1} parent=43 // pred_check_branch
              %262 = sbr.rel (0) target = $region48
            $region47: #{dsd_fc_forward.1} parent=43 // pred_region
              loop: start=0, step=1, limit=1
              $region49: #{dsd_fc_forward.1} parent=47 // loop_pre_header
                _
              $region50: #{dsd_fc_forward.1} parent=47 // loop_header
                %s264 = sphi 0, %s268
                %p265 = scmp.ge.s32.totalorder %s264, 1
                %s269 = sphi %s258, %s258
                %s270 = sphi %s252, %s252
              $region51: #{dsd_fc_forward.1} parent=47 // loop_header_branch
                %267 = sbr.rel (%p265) target = $region55
              $region52: #{dsd_fc_forward.1} parent=47 // loop_body
                %v271 = vld [vmem:[%s269] sm:$0xff]
                %272 = vst [vmem:[%s270] sm:$0xff] %v271
                %v273 = vld [vmem:[%s269 + $0x8] sm:$0xff]
                %274 = vst [vmem:[%s270 + $0x8] sm:$0xff] %v273
                %v275 = vld [vmem:[%s269 + $0x10] sm:$0xff]
                %276 = vst [vmem:[%s270 + $0x10] sm:$0xff] %v275
                %v277 = vld [vmem:[%s269 + $0x18] sm:$0xff]
                %278 = vst [vmem:[%s270 + $0x18] sm:$0xff] %v277
                %v279 = vld [vmem:[%s269 + $0x20] sm:$0xff]
                %280 = vst [vmem:[%s270 + $0x20] sm:$0xff] %v279
                %v281 = vld [vmem:[%s269 + $0x28] sm:$0xff]
                %282 = vst [vmem:[%s270 + $0x28] sm:$0xff] %v281
                %v283 = vld [vmem:[%s269 + $0x30] sm:$0xff]
                %284 = vst [vmem:[%s270 + $0x30] sm:$0xff] %v283
                %v285 = vld [vmem:[%s269 + $0x38] sm:$0xff]
                %286 = vst [vmem:[%s270 + $0x38] sm:$0xff] %v285
                %v287 = vld [vmem:[%s269 + $0x40] sm:$0xff]
                %288 = vst [vmem:[%s270 + $0x40] sm:$0xff] %v287
                %v289 = vld [vmem:[%s269 + $0x48] sm:$0xff]
                %290 = vst [vmem:[%s270 + $0x48] sm:$0xff] %v289
                %v291 = vld [vmem:[%s269 + $0x50] sm:$0xff]
                %292 = vst [vmem:[%s270 + $0x50] sm:$0xff] %v291
                %v293 = vld [vmem:[%s269 + $0x58] sm:$0xff]
                %294 = vst [vmem:[%s270 + $0x58] sm:$0xff] %v293
                %v295 = vld [vmem:[%s269 + $0x60] sm:$0xff]
                %296 = vst [vmem:[%s270 + $0x60] sm:$0xff] %v295
                %v297 = vld [vmem:[%s269 + $0x68] sm:$0xff]
                %298 = vst [vmem:[%s270 + $0x68] sm:$0xff] %v297
                %v299 = vld [vmem:[%s269 + $0x70] sm:$0xff]
                %300 = vst [vmem:[%s270 + $0x70] sm:$0xff] %v299
                %v301 = vld [vmem:[%s269 + $0x78] sm:$0xff]
                %302 = vst [vmem:[%s270 + $0x78] sm:$0xff] %v301
                %v303 = vld [vmem:[%s269 + $0x80] sm:$0xff]
                %304 = vst [vmem:[%s270 + $0x80] sm:$0xff] %v303
                %v305 = vld [vmem:[%s269 + $0x88] sm:$0xff]
                %306 = vst [vmem:[%s270 + $0x88] sm:$0xff] %v305
                %v307 = vld [vmem:[%s269 + $0x90] sm:$0xff]
                %308 = vst [vmem:[%s270 + $0x90] sm:$0xff] %v307
                %v309 = vld [vmem:[%s269 + $0x98] sm:$0xff]
                %310 = vst [vmem:[%s270 + $0x98] sm:$0xff] %v309
                %v311 = vld [vmem:[%s269 + $0xa0] sm:$0xff]
                %312 = vst [vmem:[%s270 + $0xa0] sm:$0xff] %v311
                %v313 = vld [vmem:[%s269 + $0xa8] sm:$0xff]
                %314 = vst [vmem:[%s270 + $0xa8] sm:$0xff] %v313
                %v315 = vld [vmem:[%s269 + $0xb0] sm:$0xff]
                %316 = vst [vmem:[%s270 + $0xb0] sm:$0xff] %v315
                %v317 = vld [vmem:[%s269 + $0xb8] sm:$0xff]
                %318 = vst [vmem:[%s270 + $0xb8] sm:$0xff] %v317
                %v319 = vld [vmem:[%s269 + $0xc0] sm:$0xff]
                %320 = vst [vmem:[%s270 + $0xc0] sm:$0xff] %v319
                %v321 = vld [vmem:[%s269 + $0xc8] sm:$0xff]
                %322 = vst [vmem:[%s270 + $0xc8] sm:$0xff] %v321
                %v323 = vld [vmem:[%s269 + $0xd0] sm:$0xff]
                %324 = vst [vmem:[%s270 + $0xd0] sm:$0xff] %v323
                %v325 = vld [vmem:[%s269 + $0xd8] sm:$0xff]
                %326 = vst [vmem:[%s270 + $0xd8] sm:$0xff] %v325
                %v327 = vld [vmem:[%s269 + $0xe0] sm:$0xff]
                %328 = vst [vmem:[%s270 + $0xe0] sm:$0xff] %v327
                %v329 = vld [vmem:[%s269 + $0xe8] sm:$0xff]
                %330 = vst [vmem:[%s270 + $0xe8] sm:$0xff] %v329
                %v331 = vld [vmem:[%s269 + $0xf0] sm:$0xff]
                %332 = vst [vmem:[%s270 + $0xf0] sm:$0xff] %v331
                %v333 = vld [vmem:[%s269 + $0xf8] sm:$0xff]
                %334 = vst [vmem:[%s270 + $0xf8] sm:$0xff] %v333
                %v335 = vld [vmem:[%s269 + $0x200] sm:$0xff]
                %336 = vst [vmem:[%s270 + $0x100] sm:$0xff] %v335
                %v337 = vld [vmem:[%s269 + $0x208] sm:$0xff]
                %338 = vst [vmem:[%s270 + $0x108] sm:$0xff] %v337
                %v339 = vld [vmem:[%s269 + $0x210] sm:$0xff]
                %340 = vst [vmem:[%s270 + $0x110] sm:$0xff] %v339
                %v341 = vld [vmem:[%s269 + $0x218] sm:$0xff]
                %342 = vst [vmem:[%s270 + $0x118] sm:$0xff] %v341
                %v343 = vld [vmem:[%s269 + $0x220] sm:$0xff]
                %344 = vst [vmem:[%s270 + $0x120] sm:$0xff] %v343
                %v345 = vld [vmem:[%s269 + $0x228] sm:$0xff]
                %346 = vst [vmem:[%s270 + $0x128] sm:$0xff] %v345
                %v347 = vld [vmem:[%s269 + $0x230] sm:$0xff]
                %348 = vst [vmem:[%s270 + $0x130] sm:$0xff] %v347
                %v349 = vld [vmem:[%s269 + $0x238] sm:$0xff]
                %350 = vst [vmem:[%s270 + $0x138] sm:$0xff] %v349
                %v351 = vld [vmem:[%s269 + $0x240] sm:$0xff]
                %352 = vst [vmem:[%s270 + $0x140] sm:$0xff] %v351
                %v353 = vld [vmem:[%s269 + $0x248] sm:$0xff]
                %354 = vst [vmem:[%s270 + $0x148] sm:$0xff] %v353
                %v355 = vld [vmem:[%s269 + $0x250] sm:$0xff]
                %356 = vst [vmem:[%s270 + $0x150] sm:$0xff] %v355
                %v357 = vld [vmem:[%s269 + $0x258] sm:$0xff]
                %358 = vst [vmem:[%s270 + $0x158] sm:$0xff] %v357
                %v359 = vld [vmem:[%s269 + $0x260] sm:$0xff]
                %360 = vst [vmem:[%s270 + $0x160] sm:$0xff] %v359
                %v361 = vld [vmem:[%s269 + $0x268] sm:$0xff]
                %362 = vst [vmem:[%s270 + $0x168] sm:$0xff] %v361
                %v363 = vld [vmem:[%s269 + $0x270] sm:$0xff]
                %364 = vst [vmem:[%s270 + $0x170] sm:$0xff] %v363
                %v365 = vld [vmem:[%s269 + $0x278] sm:$0xff]
                %366 = vst [vmem:[%s270 + $0x178] sm:$0xff] %v365
                %v367 = vld [vmem:[%s269 + $0x280] sm:$0xff]
                %368 = vst [vmem:[%s270 + $0x180] sm:$0xff] %v367
                %v369 = vld [vmem:[%s269 + $0x288] sm:$0xff]
                %370 = vst [vmem:[%s270 + $0x188] sm:$0xff] %v369
                %v371 = vld [vmem:[%s269 + $0x290] sm:$0xff]
                %372 = vst [vmem:[%s270 + $0x190] sm:$0xff] %v371
                %v373 = vld [vmem:[%s269 + $0x298] sm:$0xff]
                %374 = vst [vmem:[%s270 + $0x198] sm:$0xff] %v373
                %v375 = vld [vmem:[%s269 + $0x2a0] sm:$0xff]
                %376 = vst [vmem:[%s270 + $0x1a0] sm:$0xff] %v375
                %v377 = vld [vmem:[%s269 + $0x2a8] sm:$0xff]
                %378 = vst [vmem:[%s270 + $0x1a8] sm:$0xff] %v377
                %v379 = vld [vmem:[%s269 + $0x2b0] sm:$0xff]
                %380 = vst [vmem:[%s270 + $0x1b0] sm:$0xff] %v379
                %v381 = vld [vmem:[%s269 + $0x2b8] sm:$0xff]
                %382 = vst [vmem:[%s270 + $0x1b8] sm:$0xff] %v381
                %v383 = vld [vmem:[%s269 + $0x2c0] sm:$0xff]
                %384 = vst [vmem:[%s270 + $0x1c0] sm:$0xff] %v383
                %v385 = vld [vmem:[%s269 + $0x2c8] sm:$0xff]
                %386 = vst [vmem:[%s270 + $0x1c8] sm:$0xff] %v385
                %v387 = vld [vmem:[%s269 + $0x2d0] sm:$0xff]
                %388 = vst [vmem:[%s270 + $0x1d0] sm:$0xff] %v387
                %v389 = vld [vmem:[%s269 + $0x2d8] sm:$0xff]
                %390 = vst [vmem:[%s270 + $0x1d8] sm:$0xff] %v389
                %v391 = vld [vmem:[%s269 + $0x2e0] sm:$0xff]
                %392 = vst [vmem:[%s270 + $0x1e0] sm:$0xff] %v391
                %v393 = vld [vmem:[%s269 + $0x2e8] sm:$0xff]
                %394 = vst [vmem:[%s270 + $0x1e8] sm:$0xff] %v393
                %v395 = vld [vmem:[%s269 + $0x2f0] sm:$0xff]
                %396 = vst [vmem:[%s270 + $0x1f0] sm:$0xff] %v395
                %v397 = vld [vmem:[%s269 + $0x2f8] sm:$0xff]
                %398 = vst [vmem:[%s270 + $0x1f8] sm:$0xff] %v397
              $region53: #{dsd_fc_forward.1} parent=47 // loop_footer
                %s268 = sadd.s32 1, %s264
              $region54: #{dsd_fc_forward.1} parent=47 // loop_footer_branch
                %263 = sbr.rel target = $region50
              $region55: #{dsd_fc_forward.1} parent=47 // loop_exit
                _
            $region48: #{dsd_fc_forward.1} parent=43 // pred_fallthru
              _
            // Predicated region
            $region56: #{dsd_fc_forward.1} parent=43 // pred_check
              _
            $region57: #{dsd_fc_forward.1} parent=43 // pred_check_branch
              %400 = sbr.rel target = $region59
            $region58: #{dsd_fc_forward.1} parent=43 // pred_region
              _
            $region59: #{dsd_fc_forward.1} parent=43 // pred_fallthru
              _
          $region44: #{dsd_fc_forward.1} parent=39 // pred_fallthru
            _
          %401 = vnop
        $region40: #{dsd_fc_forward.1} parent=35 // pred_fallthru
          _
        // Predicated region
        $region60: #{dsd_fc_forward.1} parent=35 // pred_check
          %p402 = pneg %p75
        $region61: #{dsd_fc_forward.1} parent=35 // pred_check_branch
          %404 = sbr.rel (%p402) target = $region63
        $region62: #{dsd_fc_forward.1} parent=35 // pred_region
          %s405 = smul.u32 512, %s23
          %p406 = scmp.lt.s32.totalorder %s405, 1023
          %s407 = scalar_select %p406, %s405, 1023
          %s408 = smul.addr %s407, 4
          %s409 = scalar_lea.vmem %s1, %s408
          %s410 = smul.u32 512, %s23
        $region63: #{dsd_fc_forward.1} parent=35 // pred_fallthru
          _
      $region36: #{dsd_fc_forward.1} parent=5 // pred_fallthru
        _
      %p411 = scmp.le.s32.totalorder 1, %s15
      %p412 = scmp.lt.s32.totalorder %s15, 3
      %p413 = pnand %p411, %p412
      %p414 = pneg %p413
      // Predicated region
      $region64: #{dsd_fc_forward.1} parent=5 // pred_check
        _
      $region65: #{dsd_fc_forward.1} parent=5 // pred_check_branch
        %416 = sbr.rel (%p413) target = $region67
      $region66: #{dsd_fc_forward.1} parent=5 // pred_region
        %s417 = ssub.s32 %s15, 1
        %s418 = sand.u32 %s42, 1
        %s419 = sand.u32 %s42, 1
        %s420 = smul.addr %s419, 512
        %s421 = scalar_lea.vmem [#allocation4], %s420
        // Predicated region
        $region68: #{dsd_fc_forward.1} parent=66 // pred_check
          %p422 = pneg %p55
        $region69: #{dsd_fc_forward.1} parent=66 // pred_check_branch
          %424 = sbr.rel (%p422) target = $region71
        $region70: #{dsd_fc_forward.1} parent=66 // pred_region
          _
        $region71: #{dsd_fc_forward.1} parent=66 // pred_fallthru
          _
        %s425 = sand.u32 %s42, 1
        %s426 = sand.u32 %s42, 1
        %s427 = smul.addr %s426, 512
        %s428 = scalar_lea.vmem [#allocation4], %s427
        %p429 = pneg %p55
        %p430 = pneg %p52
        %s431 = smul.u32 512, %s25
        %p432 = scmp.lt.s32.totalorder %s431, 1023
        %s433 = scalar_select %p432, %s431, 1023
        %s434 = smul.addr %s433, 4
        %s435 = scalar_lea.vmem %s1, %s434
        %p436 = pneg %p81
        %p437 = pneg %p78
        %p438 = pneg %p102
        %p439 = pneg %p99
        %p440 = pneg %p123
        %p441 = pneg %p120
        %p442 = pneg %p144
        %p443 = pneg %p141
        %p444 = pneg %p165
        %p445 = pneg %p162
        %p446 = pneg %p186
        %p447 = pneg %p183
        %p448 = pneg %p212
        %p449 = pneg %p209
        %s450 = smul.u32 2, %s24
        %p451 = scmp.lt.s32.totalorder %s450, 1
        %s452 = scalar_select %p451, %s450, 1
        %s453 = smul.addr %s452, 8
        %s454 = scalar_lea.vmem %s7, %s453
        %s455 = smul.u32 2, %s24
        %s456 = smul.u32 32, %s25
        %s457 = smul.u32 512, %s25
        %p458 = scmp.lt.s32.totalorder %s457, 1023
        %s459 = scalar_select %p458, %s457, 1023
        %s460 = smul.addr %s459, 4
        %s461 = scalar_lea.vmem %s1, %s460
        %s462 = smul.u32 512, %s25
        %s463 = smul.u32 2, %s24
        %p464 = scmp.lt.s32.totalorder %s463, 1
        %s465 = scalar_select %p464, %s463, 1
        %s466 = smul.addr %s465, 8
        %s467 = scalar_lea.vmem %s7, %s466
        %s468 = smul.u32 2, %s24
        %p469 = scmp.eq.s32.totalorder %s25, 0
        // Predicated region
        $region72: #{dsd_fc_forward.1} parent=66 // pred_check
          %p470 = pneg %p469
        $region73: #{dsd_fc_forward.1} parent=66 // pred_check_branch
          %472 = sbr.rel (%p470) target = $region75
        $region74: #{dsd_fc_forward.1} parent=66 // pred_region
          %473 = vst [vmem:[#allocation2] sm:$0xff] 0.0
          %474 = vst [vmem:[#allocation2 + $0x8] sm:$0xff] 0.0
        $region75: #{dsd_fc_forward.1} parent=66 // pred_fallthru
          _
        %v475 = vld [vmem:[#allocation2] sm:$0xff]
        %v476 = vld [vmem:[#allocation2 + $0x8] sm:$0xff]
        %v477 = vld [vmem:[%s421] sm:$0xff]
        %v478 = vld [vmem:[%s421 + $0x8] sm:$0xff]
        %v479 = vld [vmem:[%s421 + $0x10] sm:$0xff]
        %v480 = vld [vmem:[%s421 + $0x18] sm:$0xff]
        %v481 = vld [vmem:[%s421 + $0x20] sm:$0xff]
        %v482 = vld [vmem:[%s421 + $0x28] sm:$0xff]
        %v483 = vld [vmem:[%s421 + $0x30] sm:$0xff]
        %v484 = vld [vmem:[%s421 + $0x38] sm:$0xff]
        %v485 = vld [vmem:[%s421 + $0x40] sm:$0xff]
        %v486 = vld [vmem:[%s421 + $0x48] sm:$0xff]
        %v487 = vld [vmem:[%s421 + $0x50] sm:$0xff]
        %v488 = vld [vmem:[%s421 + $0x58] sm:$0xff]
        %v489 = vld [vmem:[%s421 + $0x60] sm:$0xff]
        %v490 = vld [vmem:[%s421 + $0x68] sm:$0xff]
        %v491 = vld [vmem:[%s421 + $0x70] sm:$0xff]
        %v492 = vld [vmem:[%s421 + $0x78] sm:$0xff]
        %v493 = vld [vmem:[%s421 + $0x80] sm:$0xff]
        %v494 = vld [vmem:[%s421 + $0x88] sm:$0xff]
        %v495 = vld [vmem:[%s421 + $0x90] sm:$0xff]
        %v496 = vld [vmem:[%s421 + $0x98] sm:$0xff]
        %v497 = vld [vmem:[%s421 + $0xa0] sm:$0xff]
        %v498 = vld [vmem:[%s421 + $0xa8] sm:$0xff]
        %v499 = vld [vmem:[%s421 + $0xb0] sm:$0xff]
        %v500 = vld [vmem:[%s421 + $0xb8] sm:$0xff]
        %v501 = vld [vmem:[%s421 + $0xc0] sm:$0xff]
        %v502 = vld [vmem:[%s421 + $0xc8] sm:$0xff]
        %v503 = vld [vmem:[%s421 + $0xd0] sm:$0xff]
        %v504 = vld [vmem:[%s421 + $0xd8] sm:$0xff]
        %v505 = vld [vmem:[%s421 + $0xe0] sm:$0xff]
        %v506 = vld [vmem:[%s421 + $0xe8] sm:$0xff]
        %v507 = vld [vmem:[%s421 + $0xf0] sm:$0xff]
        %v508 = vld [vmem:[%s421 + $0xf8] sm:$0xff]
        %v509 = vld [vmem:[%s421 + $0x100] sm:$0xff]
        %v510 = vld [vmem:[%s421 + $0x108] sm:$0xff]
        %v511 = vld [vmem:[%s421 + $0x110] sm:$0xff]
        %v512 = vld [vmem:[%s421 + $0x118] sm:$0xff]
        %v513 = vld [vmem:[%s421 + $0x120] sm:$0xff]
        %v514 = vld [vmem:[%s421 + $0x128] sm:$0xff]
        %v515 = vld [vmem:[%s421 + $0x130] sm:$0xff]
        %v516 = vld [vmem:[%s421 + $0x138] sm:$0xff]
        %v517 = vld [vmem:[%s421 + $0x140] sm:$0xff]
        %v518 = vld [vmem:[%s421 + $0x148] sm:$0xff]
        %v519 = vld [vmem:[%s421 + $0x150] sm:$0xff]
        %v520 = vld [vmem:[%s421 + $0x158] sm:$0xff]
        %v521 = vld [vmem:[%s421 + $0x160] sm:$0xff]
        %v522 = vld [vmem:[%s421 + $0x168] sm:$0xff]
        %v523 = vld [vmem:[%s421 + $0x170] sm:$0xff]
        %v524 = vld [vmem:[%s421 + $0x178] sm:$0xff]
        %v525 = vld [vmem:[%s421 + $0x180] sm:$0xff]
        %v526 = vld [vmem:[%s421 + $0x188] sm:$0xff]
        %v527 = vld [vmem:[%s421 + $0x190] sm:$0xff]
        %v528 = vld [vmem:[%s421 + $0x198] sm:$0xff]
        %v529 = vld [vmem:[%s421 + $0x1a0] sm:$0xff]
        %v530 = vld [vmem:[%s421 + $0x1a8] sm:$0xff]
        %v531 = vld [vmem:[%s421 + $0x1b0] sm:$0xff]
        %v532 = vld [vmem:[%s421 + $0x1b8] sm:$0xff]
        %v533 = vld [vmem:[%s421 + $0x1c0] sm:$0xff]
        %v534 = vld [vmem:[%s421 + $0x1c8] sm:$0xff]
        %v535 = vld [vmem:[%s421 + $0x1d0] sm:$0xff]
        %v536 = vld [vmem:[%s421 + $0x1d8] sm:$0xff]
        %v537 = vld [vmem:[%s421 + $0x1e0] sm:$0xff]
        %v538 = vld [vmem:[%s421 + $0x1e8] sm:$0xff]
        %v539 = vld [vmem:[%s421 + $0x1f0] sm:$0xff]
        %v540 = vld [vmem:[%s421 + $0x1f8] sm:$0xff]
        %v541 = vpack.c.bf16 %v509, %v477
        %v542 = vpack.c.bf16 %v510, %v478
        %v543 = vpack.c.bf16 %v511, %v479
        %v544 = vpack.c.bf16 %v512, %v480
        %v545 = vpack.c.bf16 %v513, %v481
        %v546 = vpack.c.bf16 %v514, %v482
        %v547 = vpack.c.bf16 %v515, %v483
        %v548 = vpack.c.bf16 %v516, %v484
        %v549 = vpack.c.bf16 %v517, %v485
        %v550 = vpack.c.bf16 %v518, %v486
        %v551 = vpack.c.bf16 %v519, %v487
        %v552 = vpack.c.bf16 %v520, %v488
        %v553 = vpack.c.bf16 %v521, %v489
        %v554 = vpack.c.bf16 %v522, %v490
        %v555 = vpack.c.bf16 %v523, %v491
        %v556 = vpack.c.bf16 %v524, %v492
        %v557 = vpack.c.bf16 %v525, %v493
        %v558 = vpack.c.bf16 %v526, %v494
        %v559 = vpack.c.bf16 %v527, %v495
        %v560 = vpack.c.bf16 %v528, %v496
        %v561 = vpack.c.bf16 %v529, %v497
        %v562 = vpack.c.bf16 %v530, %v498
        %v563 = vpack.c.bf16 %v531, %v499
        %v564 = vpack.c.bf16 %v532, %v500
        %v565 = vpack.c.bf16 %v533, %v501
        %v566 = vpack.c.bf16 %v534, %v502
        %v567 = vpack.c.bf16 %v535, %v503
        %v568 = vpack.c.bf16 %v536, %v504
        %v569 = vpack.c.bf16 %v537, %v505
        %v570 = vpack.c.bf16 %v538, %v506
        %v571 = vpack.c.bf16 %v539, %v507
        %v572 = vpack.c.bf16 %v540, %v508
        %v573 = vld [vmem:[%s461] sm:$0xf]
        %v574 = vld [vmem:[%s461 + $0x4] sm:$0xf]
        %v575 = vld [vmem:[%s461 + $0x8] sm:$0xf]
        %v576 = vld [vmem:[%s461 + $0xc] sm:$0xf]
        %v577 = vld [vmem:[%s461 + $0x10] sm:$0xf]
        %v578 = vld [vmem:[%s461 + $0x14] sm:$0xf]
        %v579 = vld [vmem:[%s461 + $0x18] sm:$0xf]
        %v580 = vld [vmem:[%s461 + $0x1c] sm:$0xf]
        %v581 = vld [vmem:[%s461 + $0x20] sm:$0xf]
        %v582 = vld [vmem:[%s461 + $0x24] sm:$0xf]
        %v583 = vld [vmem:[%s461 + $0x28] sm:$0xf]
        %v584 = vld [vmem:[%s461 + $0x2c] sm:$0xf]
        %v585 = vld [vmem:[%s461 + $0x30] sm:$0xf]
        %v586 = vld [vmem:[%s461 + $0x34] sm:$0xf]
        %v587 = vld [vmem:[%s461 + $0x38] sm:$0xf]
        %v588 = vld [vmem:[%s461 + $0x3c] sm:$0xf]
        %v589 = vld [vmem:[%s461 + $0x40] sm:$0xf]
        %v590 = vld [vmem:[%s461 + $0x44] sm:$0xf]
        %v591 = vld [vmem:[%s461 + $0x48] sm:$0xf]
        %v592 = vld [vmem:[%s461 + $0x4c] sm:$0xf]
        %v593 = vld [vmem:[%s461 + $0x50] sm:$0xf]
        %v594 = vld [vmem:[%s461 + $0x54] sm:$0xf]
        %v595 = vld [vmem:[%s461 + $0x58] sm:$0xf]
        %v596 = vld [vmem:[%s461 + $0x5c] sm:$0xf]
        %v597 = vld [vmem:[%s461 + $0x60] sm:$0xf]
        %v598 = vld [vmem:[%s461 + $0x64] sm:$0xf]
        %v599 = vld [vmem:[%s461 + $0x68] sm:$0xf]
        %v600 = vld [vmem:[%s461 + $0x6c] sm:$0xf]
        %v601 = vld [vmem:[%s461 + $0x70] sm:$0xf]
        %v602 = vld [vmem:[%s461 + $0x74] sm:$0xf]
        %v603 = vld [vmem:[%s461 + $0x78] sm:$0xf]
        %v604 = vld [vmem:[%s461 + $0x7c] sm:$0xf]
        %v605 = vld [vmem:[%s461 + $0x80] sm:$0xf]
        %v606 = vld [vmem:[%s461 + $0x84] sm:$0xf]
        %v607 = vld [vmem:[%s461 + $0x88] sm:$0xf]
        %v608 = vld [vmem:[%s461 + $0x8c] sm:$0xf]
        %v609 = vld [vmem:[%s461 + $0x90] sm:$0xf]
        %v610 = vld [vmem:[%s461 + $0x94] sm:$0xf]
        %v611 = vld [vmem:[%s461 + $0x98] sm:$0xf]
        %v612 = vld [vmem:[%s461 + $0x9c] sm:$0xf]
        %v613 = vld [vmem:[%s461 + $0xa0] sm:$0xf]
        %v614 = vld [vmem:[%s461 + $0xa4] sm:$0xf]
        %v615 = vld [vmem:[%s461 + $0xa8] sm:$0xf]
        %v616 = vld [vmem:[%s461 + $0xac] sm:$0xf]
        %v617 = vld [vmem:[%s461 + $0xb0] sm:$0xf]
        %v618 = vld [vmem:[%s461 + $0xb4] sm:$0xf]
        %v619 = vld [vmem:[%s461 + $0xb8] sm:$0xf]
        %v620 = vld [vmem:[%s461 + $0xbc] sm:$0xf]
        %v621 = vld [vmem:[%s461 + $0xc0] sm:$0xf]
        %v622 = vld [vmem:[%s461 + $0xc4] sm:$0xf]
        %v623 = vld [vmem:[%s461 + $0xc8] sm:$0xf]
        %v624 = vld [vmem:[%s461 + $0xcc] sm:$0xf]
        %v625 = vld [vmem:[%s461 + $0xd0] sm:$0xf]
        %v626 = vld [vmem:[%s461 + $0xd4] sm:$0xf]
        %v627 = vld [vmem:[%s461 + $0xd8] sm:$0xf]
        %v628 = vld [vmem:[%s461 + $0xdc] sm:$0xf]
        %v629 = vld [vmem:[%s461 + $0xe0] sm:$0xf]
        %v630 = vld [vmem:[%s461 + $0xe4] sm:$0xf]
        %v631 = vld [vmem:[%s461 + $0xe8] sm:$0xf]
        %v632 = vld [vmem:[%s461 + $0xec] sm:$0xf]
        %v633 = vld [vmem:[%s461 + $0xf0] sm:$0xf]
        %v634 = vld [vmem:[%s461 + $0xf4] sm:$0xf]
        %v635 = vld [vmem:[%s461 + $0xf8] sm:$0xf]
        %v636 = vld [vmem:[%s461 + $0xfc] sm:$0xf]
        %v637 = vld [vmem:[%s461 + $0x100] sm:$0xf]
        %v638 = vld [vmem:[%s461 + $0x104] sm:$0xf]
        %v639 = vld [vmem:[%s461 + $0x108] sm:$0xf]
        %v640 = vld [vmem:[%s461 + $0x10c] sm:$0xf]
        %v641 = vld [vmem:[%s461 + $0x110] sm:$0xf]
        %v642 = vld [vmem:[%s461 + $0x114] sm:$0xf]
        %v643 = vld [vmem:[%s461 + $0x118] sm:$0xf]
        %v644 = vld [vmem:[%s461 + $0x11c] sm:$0xf]
        %v645 = vld [vmem:[%s461 + $0x120] sm:$0xf]
        %v646 = vld [vmem:[%s461 + $0x124] sm:$0xf]
        %v647 = vld [vmem:[%s461 + $0x128] sm:$0xf]
        %v648 = vld [vmem:[%s461 + $0x12c] sm:$0xf]
        %v649 = vld [vmem:[%s461 + $0x130] sm:$0xf]
        %v650 = vld [vmem:[%s461 + $0x134] sm:$0xf]
        %v651 = vld [vmem:[%s461 + $0x138] sm:$0xf]
        %v652 = vld [vmem:[%s461 + $0x13c] sm:$0xf]
        %v653 = vld [vmem:[%s461 + $0x140] sm:$0xf]
        %v654 = vld [vmem:[%s461 + $0x144] sm:$0xf]
        %v655 = vld [vmem:[%s461 + $0x148] sm:$0xf]
        %v656 = vld [vmem:[%s461 + $0x14c] sm:$0xf]
        %v657 = vld [vmem:[%s461 + $0x150] sm:$0xf]
        %v658 = vld [vmem:[%s461 + $0x154] sm:$0xf]
        %v659 = vld [vmem:[%s461 + $0x158] sm:$0xf]
        %v660 = vld [vmem:[%s461 + $0x15c] sm:$0xf]
        %v661 = vld [vmem:[%s461 + $0x160] sm:$0xf]
        %v662 = vld [vmem:[%s461 + $0x164] sm:$0xf]
        %v663 = vld [vmem:[%s461 + $0x168] sm:$0xf]
        %v664 = vld [vmem:[%s461 + $0x16c] sm:$0xf]
        %v665 = vld [vmem:[%s461 + $0x170] sm:$0xf]
        %v666 = vld [vmem:[%s461 + $0x174] sm:$0xf]
        %v667 = vld [vmem:[%s461 + $0x178] sm:$0xf]
        %v668 = vld [vmem:[%s461 + $0x17c] sm:$0xf]
        %v669 = vld [vmem:[%s461 + $0x180] sm:$0xf]
        %v670 = vld [vmem:[%s461 + $0x184] sm:$0xf]
        %v671 = vld [vmem:[%s461 + $0x188] sm:$0xf]
        %v672 = vld [vmem:[%s461 + $0x18c] sm:$0xf]
        %v673 = vld [vmem:[%s461 + $0x190] sm:$0xf]
        %v674 = vld [vmem:[%s461 + $0x194] sm:$0xf]
        %v675 = vld [vmem:[%s461 + $0x198] sm:$0xf]
        %v676 = vld [vmem:[%s461 + $0x19c] sm:$0xf]
        %v677 = vld [vmem:[%s461 + $0x1a0] sm:$0xf]
        %v678 = vld [vmem:[%s461 + $0x1a4] sm:$0xf]
        %v679 = vld [vmem:[%s461 + $0x1a8] sm:$0xf]
        %v680 = vld [vmem:[%s461 + $0x1ac] sm:$0xf]
        %v681 = vld [vmem:[%s461 + $0x1b0] sm:$0xf]
        %v682 = vld [vmem:[%s461 + $0x1b4] sm:$0xf]
        %v683 = vld [vmem:[%s461 + $0x1b8] sm:$0xf]
        %v684 = vld [vmem:[%s461 + $0x1bc] sm:$0xf]
        %v685 = vld [vmem:[%s461 + $0x1c0] sm:$0xf]
        %v686 = vld [vmem:[%s461 + $0x1c4] sm:$0xf]
        %v687 = vld [vmem:[%s461 + $0x1c8] sm:$0xf]
        %v688 = vld [vmem:[%s461 + $0x1cc] sm:$0xf]
        %v689 = vld [vmem:[%s461 + $0x1d0] sm:$0xf]
        %v690 = vld [vmem:[%s461 + $0x1d4] sm:$0xf]
        %v691 = vld [vmem:[%s461 + $0x1d8] sm:$0xf]
        %v692 = vld [vmem:[%s461 + $0x1dc] sm:$0xf]
        %v693 = vld [vmem:[%s461 + $0x1e0] sm:$0xf]
        %v694 = vld [vmem:[%s461 + $0x1e4] sm:$0xf]
        %v695 = vld [vmem:[%s461 + $0x1e8] sm:$0xf]
        %v696 = vld [vmem:[%s461 + $0x1ec] sm:$0xf]
        %v697 = vld [vmem:[%s461 + $0x1f0] sm:$0xf]
        %v698 = vld [vmem:[%s461 + $0x1f4] sm:$0xf]
        %v699 = vld [vmem:[%s461 + $0x1f8] sm:$0xf]
        %v700 = vld [vmem:[%s461 + $0x1fc] sm:$0xf]
        %v701 = vld [vmem:[%s461 + $0x200] sm:$0xf]
        %v702 = vld [vmem:[%s461 + $0x204] sm:$0xf]
        %v703 = vld [vmem:[%s461 + $0x208] sm:$0xf]
        %v704 = vld [vmem:[%s461 + $0x20c] sm:$0xf]
        %v705 = vld [vmem:[%s461 + $0x210] sm:$0xf]
        %v706 = vld [vmem:[%s461 + $0x214] sm:$0xf]
        %v707 = vld [vmem:[%s461 + $0x218] sm:$0xf]
        %v708 = vld [vmem:[%s461 + $0x21c] sm:$0xf]
        %v709 = vld [vmem:[%s461 + $0x220] sm:$0xf]
        %v710 = vld [vmem:[%s461 + $0x224] sm:$0xf]
        %v711 = vld [vmem:[%s461 + $0x228] sm:$0xf]
        %v712 = vld [vmem:[%s461 + $0x22c] sm:$0xf]
        %v713 = vld [vmem:[%s461 + $0x230] sm:$0xf]
        %v714 = vld [vmem:[%s461 + $0x234] sm:$0xf]
        %v715 = vld [vmem:[%s461 + $0x238] sm:$0xf]
        %v716 = vld [vmem:[%s461 + $0x23c] sm:$0xf]
        %v717 = vld [vmem:[%s461 + $0x240] sm:$0xf]
        %v718 = vld [vmem:[%s461 + $0x244] sm:$0xf]
        %v719 = vld [vmem:[%s461 + $0x248] sm:$0xf]
        %v720 = vld [vmem:[%s461 + $0x24c] sm:$0xf]
        %v721 = vld [vmem:[%s461 + $0x250] sm:$0xf]
        %v722 = vld [vmem:[%s461 + $0x254] sm:$0xf]
        %v723 = vld [vmem:[%s461 + $0x258] sm:$0xf]
        %v724 = vld [vmem:[%s461 + $0x25c] sm:$0xf]
        %v725 = vld [vmem:[%s461 + $0x260] sm:$0xf]
        %v726 = vld [vmem:[%s461 + $0x264] sm:$0xf]
        %v727 = vld [vmem:[%s461 + $0x268] sm:$0xf]
        %v728 = vld [vmem:[%s461 + $0x26c] sm:$0xf]
        %v729 = vld [vmem:[%s461 + $0x270] sm:$0xf]
        %v730 = vld [vmem:[%s461 + $0x274] sm:$0xf]
        %v731 = vld [vmem:[%s461 + $0x278] sm:$0xf]
        %v732 = vld [vmem:[%s461 + $0x27c] sm:$0xf]
        %v733 = vld [vmem:[%s461 + $0x280] sm:$0xf]
        %v734 = vld [vmem:[%s461 + $0x284] sm:$0xf]
        %v735 = vld [vmem:[%s461 + $0x288] sm:$0xf]
        %v736 = vld [vmem:[%s461 + $0x28c] sm:$0xf]
        %v737 = vld [vmem:[%s461 + $0x290] sm:$0xf]
        %v738 = vld [vmem:[%s461 + $0x294] sm:$0xf]
        %v739 = vld [vmem:[%s461 + $0x298] sm:$0xf]
        %v740 = vld [vmem:[%s461 + $0x29c] sm:$0xf]
        %v741 = vld [vmem:[%s461 + $0x2a0] sm:$0xf]
        %v742 = vld [vmem:[%s461 + $0x2a4] sm:$0xf]
        %v743 = vld [vmem:[%s461 + $0x2a8] sm:$0xf]
        %v744 = vld [vmem:[%s461 + $0x2ac] sm:$0xf]
        %v745 = vld [vmem:[%s461 + $0x2b0] sm:$0xf]
        %v746 = vld [vmem:[%s461 + $0x2b4] sm:$0xf]
        %v747 = vld [vmem:[%s461 + $0x2b8] sm:$0xf]
        %v748 = vld [vmem:[%s461 + $0x2bc] sm:$0xf]
        %v749 = vld [vmem:[%s461 + $0x2c0] sm:$0xf]
        %v750 = vld [vmem:[%s461 + $0x2c4] sm:$0xf]
        %v751 = vld [vmem:[%s461 + $0x2c8] sm:$0xf]
        %v752 = vld [vmem:[%s461 + $0x2cc] sm:$0xf]
        %v753 = vld [vmem:[%s461 + $0x2d0] sm:$0xf]
        %v754 = vld [vmem:[%s461 + $0x2d4] sm:$0xf]
        %v755 = vld [vmem:[%s461 + $0x2d8] sm:$0xf]
        %v756 = vld [vmem:[%s461 + $0x2dc] sm:$0xf]
        %v757 = vld [vmem:[%s461 + $0x2e0] sm:$0xf]
        %v758 = vld [vmem:[%s461 + $0x2e4] sm:$0xf]
        %v759 = vld [vmem:[%s461 + $0x2e8] sm:$0xf]
        %v760 = vld [vmem:[%s461 + $0x2ec] sm:$0xf]
        %v761 = vld [vmem:[%s461 + $0x2f0] sm:$0xf]
        %v762 = vld [vmem:[%s461 + $0x2f4] sm:$0xf]
        %v763 = vld [vmem:[%s461 + $0x2f8] sm:$0xf]
        %v764 = vld [vmem:[%s461 + $0x2fc] sm:$0xf]
        %v765 = vld [vmem:[%s461 + $0x300] sm:$0xf]
        %v766 = vld [vmem:[%s461 + $0x304] sm:$0xf]
        %v767 = vld [vmem:[%s461 + $0x308] sm:$0xf]
        %v768 = vld [vmem:[%s461 + $0x30c] sm:$0xf]
        %v769 = vld [vmem:[%s461 + $0x310] sm:$0xf]
        %v770 = vld [vmem:[%s461 + $0x314] sm:$0xf]
        %v771 = vld [vmem:[%s461 + $0x318] sm:$0xf]
        %v772 = vld [vmem:[%s461 + $0x31c] sm:$0xf]
        %v773 = vld [vmem:[%s461 + $0x320] sm:$0xf]
        %v774 = vld [vmem:[%s461 + $0x324] sm:$0xf]
        %v775 = vld [vmem:[%s461 + $0x328] sm:$0xf]
        %v776 = vld [vmem:[%s461 + $0x32c] sm:$0xf]
        %v777 = vld [vmem:[%s461 + $0x330] sm:$0xf]
        %v778 = vld [vmem:[%s461 + $0x334] sm:$0xf]
        %v779 = vld [vmem:[%s461 + $0x338] sm:$0xf]
        %v780 = vld [vmem:[%s461 + $0x33c] sm:$0xf]
        %v781 = vld [vmem:[%s461 + $0x340] sm:$0xf]
        %v782 = vld [vmem:[%s461 + $0x344] sm:$0xf]
        %v783 = vld [vmem:[%s461 + $0x348] sm:$0xf]
        %v784 = vld [vmem:[%s461 + $0x34c] sm:$0xf]
        %v785 = vld [vmem:[%s461 + $0x350] sm:$0xf]
        %v786 = vld [vmem:[%s461 + $0x354] sm:$0xf]
        %v787 = vld [vmem:[%s461 + $0x358] sm:$0xf]
        %v788 = vld [vmem:[%s461 + $0x35c] sm:$0xf]
        %v789 = vld [vmem:[%s461 + $0x360] sm:$0xf]
        %v790 = vld [vmem:[%s461 + $0x364] sm:$0xf]
        %v791 = vld [vmem:[%s461 + $0x368] sm:$0xf]
        %v792 = vld [vmem:[%s461 + $0x36c] sm:$0xf]
        %v793 = vld [vmem:[%s461 + $0x370] sm:$0xf]
        %v794 = vld [vmem:[%s461 + $0x374] sm:$0xf]
        %v795 = vld [vmem:[%s461 + $0x378] sm:$0xf]
        %v796 = vld [vmem:[%s461 + $0x37c] sm:$0xf]
        %v797 = vld [vmem:[%s461 + $0x380] sm:$0xf]
        %v798 = vld [vmem:[%s461 + $0x384] sm:$0xf]
        %v799 = vld [vmem:[%s461 + $0x388] sm:$0xf]
        %v800 = vld [vmem:[%s461 + $0x38c] sm:$0xf]
        %v801 = vld [vmem:[%s461 + $0x390] sm:$0xf]
        %v802 = vld [vmem:[%s461 + $0x394] sm:$0xf]
        %v803 = vld [vmem:[%s461 + $0x398] sm:$0xf]
        %v804 = vld [vmem:[%s461 + $0x39c] sm:$0xf]
        %v805 = vld [vmem:[%s461 + $0x3a0] sm:$0xf]
        %v806 = vld [vmem:[%s461 + $0x3a4] sm:$0xf]
        %v807 = vld [vmem:[%s461 + $0x3a8] sm:$0xf]
        %v808 = vld [vmem:[%s461 + $0x3ac] sm:$0xf]
        %v809 = vld [vmem:[%s461 + $0x3b0] sm:$0xf]
        %v810 = vld [vmem:[%s461 + $0x3b4] sm:$0xf]
        %v811 = vld [vmem:[%s461 + $0x3b8] sm:$0xf]
        %v812 = vld [vmem:[%s461 + $0x3bc] sm:$0xf]
        %v813 = vld [vmem:[%s461 + $0x3c0] sm:$0xf]
        %v814 = vld [vmem:[%s461 + $0x3c4] sm:$0xf]
        %v815 = vld [vmem:[%s461 + $0x3c8] sm:$0xf]
        %v816 = vld [vmem:[%s461 + $0x3cc] sm:$0xf]
        %v817 = vld [vmem:[%s461 + $0x3d0] sm:$0xf]
        %v818 = vld [vmem:[%s461 + $0x3d4] sm:$0xf]
        %v819 = vld [vmem:[%s461 + $0x3d8] sm:$0xf]
        %v820 = vld [vmem:[%s461 + $0x3dc] sm:$0xf]
        %v821 = vld [vmem:[%s461 + $0x3e0] sm:$0xf]
        %v822 = vld [vmem:[%s461 + $0x3e4] sm:$0xf]
        %v823 = vld [vmem:[%s461 + $0x3e8] sm:$0xf]
        %v824 = vld [vmem:[%s461 + $0x3ec] sm:$0xf]
        %v825 = vld [vmem:[%s461 + $0x3f0] sm:$0xf]
        %v826 = vld [vmem:[%s461 + $0x3f4] sm:$0xf]
        %v827 = vld [vmem:[%s461 + $0x3f8] sm:$0xf]
        %v828 = vld [vmem:[%s461 + $0x3fc] sm:$0xf]
        %v829 = vld [vmem:[%s461 + $0x400] sm:$0xf]
        %v830 = vld [vmem:[%s461 + $0x404] sm:$0xf]
        %v831 = vld [vmem:[%s461 + $0x408] sm:$0xf]
        %v832 = vld [vmem:[%s461 + $0x40c] sm:$0xf]
        %v833 = vld [vmem:[%s461 + $0x410] sm:$0xf]
        %v834 = vld [vmem:[%s461 + $0x414] sm:$0xf]
        %v835 = vld [vmem:[%s461 + $0x418] sm:$0xf]
        %v836 = vld [vmem:[%s461 + $0x41c] sm:$0xf]
        %v837 = vld [vmem:[%s461 + $0x420] sm:$0xf]
        %v838 = vld [vmem:[%s461 + $0x424] sm:$0xf]
        %v839 = vld [vmem:[%s461 + $0x428] sm:$0xf]
        %v840 = vld [vmem:[%s461 + $0x42c] sm:$0xf]
        %v841 = vld [vmem:[%s461 + $0x430] sm:$0xf]
        %v842 = vld [vmem:[%s461 + $0x434] sm:$0xf]
        %v843 = vld [vmem:[%s461 + $0x438] sm:$0xf]
        %v844 = vld [vmem:[%s461 + $0x43c] sm:$0xf]
        %v845 = vld [vmem:[%s461 + $0x440] sm:$0xf]
        %v846 = vld [vmem:[%s461 + $0x444] sm:$0xf]
        %v847 = vld [vmem:[%s461 + $0x448] sm:$0xf]
        %v848 = vld [vmem:[%s461 + $0x44c] sm:$0xf]
        %v849 = vld [vmem:[%s461 + $0x450] sm:$0xf]
        %v850 = vld [vmem:[%s461 + $0x454] sm:$0xf]
        %v851 = vld [vmem:[%s461 + $0x458] sm:$0xf]
        %v852 = vld [vmem:[%s461 + $0x45c] sm:$0xf]
        %v853 = vld [vmem:[%s461 + $0x460] sm:$0xf]
        %v854 = vld [vmem:[%s461 + $0x464] sm:$0xf]
        %v855 = vld [vmem:[%s461 + $0x468] sm:$0xf]
        %v856 = vld [vmem:[%s461 + $0x46c] sm:$0xf]
        %v857 = vld [vmem:[%s461 + $0x470] sm:$0xf]
        %v858 = vld [vmem:[%s461 + $0x474] sm:$0xf]
        %v859 = vld [vmem:[%s461 + $0x478] sm:$0xf]
        %v860 = vld [vmem:[%s461 + $0x47c] sm:$0xf]
        %v861 = vld [vmem:[%s461 + $0x480] sm:$0xf]
        %v862 = vld [vmem:[%s461 + $0x484] sm:$0xf]
        %v863 = vld [vmem:[%s461 + $0x488] sm:$0xf]
        %v864 = vld [vmem:[%s461 + $0x48c] sm:$0xf]
        %v865 = vld [vmem:[%s461 + $0x490] sm:$0xf]
        %v866 = vld [vmem:[%s461 + $0x494] sm:$0xf]
        %v867 = vld [vmem:[%s461 + $0x498] sm:$0xf]
        %v868 = vld [vmem:[%s461 + $0x49c] sm:$0xf]
        %v869 = vld [vmem:[%s461 + $0x4a0] sm:$0xf]
        %v870 = vld [vmem:[%s461 + $0x4a4] sm:$0xf]
        %v871 = vld [vmem:[%s461 + $0x4a8] sm:$0xf]
        %v872 = vld [vmem:[%s461 + $0x4ac] sm:$0xf]
        %v873 = vld [vmem:[%s461 + $0x4b0] sm:$0xf]
        %v874 = vld [vmem:[%s461 + $0x4b4] sm:$0xf]
        %v875 = vld [vmem:[%s461 + $0x4b8] sm:$0xf]
        %v876 = vld [vmem:[%s461 + $0x4bc] sm:$0xf]
        %v877 = vld [vmem:[%s461 + $0x4c0] sm:$0xf]
        %v878 = vld [vmem:[%s461 + $0x4c4] sm:$0xf]
        %v879 = vld [vmem:[%s461 + $0x4c8] sm:$0xf]
        %v880 = vld [vmem:[%s461 + $0x4cc] sm:$0xf]
        %v881 = vld [vmem:[%s461 + $0x4d0] sm:$0xf]
        %v882 = vld [vmem:[%s461 + $0x4d4] sm:$0xf]
        %v883 = vld [vmem:[%s461 + $0x4d8] sm:$0xf]
        %v884 = vld [vmem:[%s461 + $0x4dc] sm:$0xf]
        %v885 = vld [vmem:[%s461 + $0x4e0] sm:$0xf]
        %v886 = vld [vmem:[%s461 + $0x4e4] sm:$0xf]
        %v887 = vld [vmem:[%s461 + $0x4e8] sm:$0xf]
        %v888 = vld [vmem:[%s461 + $0x4ec] sm:$0xf]
        %v889 = vld [vmem:[%s461 + $0x4f0] sm:$0xf]
        %v890 = vld [vmem:[%s461 + $0x4f4] sm:$0xf]
        %v891 = vld [vmem:[%s461 + $0x4f8] sm:$0xf]
        %v892 = vld [vmem:[%s461 + $0x4fc] sm:$0xf]
        %v893 = vld [vmem:[%s461 + $0x500] sm:$0xf]
        %v894 = vld [vmem:[%s461 + $0x504] sm:$0xf]
        %v895 = vld [vmem:[%s461 + $0x508] sm:$0xf]
        %v896 = vld [vmem:[%s461 + $0x50c] sm:$0xf]
        %v897 = vld [vmem:[%s461 + $0x510] sm:$0xf]
        %v898 = vld [vmem:[%s461 + $0x514] sm:$0xf]
        %v899 = vld [vmem:[%s461 + $0x518] sm:$0xf]
        %v900 = vld [vmem:[%s461 + $0x51c] sm:$0xf]
        %v901 = vld [vmem:[%s461 + $0x520] sm:$0xf]
        %v902 = vld [vmem:[%s461 + $0x524] sm:$0xf]
        %v903 = vld [vmem:[%s461 + $0x528] sm:$0xf]
        %v904 = vld [vmem:[%s461 + $0x52c] sm:$0xf]
        %v905 = vld [vmem:[%s461 + $0x530] sm:$0xf]
        %v906 = vld [vmem:[%s461 + $0x534] sm:$0xf]
        %v907 = vld [vmem:[%s461 + $0x538] sm:$0xf]
        %v908 = vld [vmem:[%s461 + $0x53c] sm:$0xf]
        %v909 = vld [vmem:[%s461 + $0x540] sm:$0xf]
        %v910 = vld [vmem:[%s461 + $0x544] sm:$0xf]
        %v911 = vld [vmem:[%s461 + $0x548] sm:$0xf]
        %v912 = vld [vmem:[%s461 + $0x54c] sm:$0xf]
        %v913 = vld [vmem:[%s461 + $0x550] sm:$0xf]
        %v914 = vld [vmem:[%s461 + $0x554] sm:$0xf]
        %v915 = vld [vmem:[%s461 + $0x558] sm:$0xf]
        %v916 = vld [vmem:[%s461 + $0x55c] sm:$0xf]
        %v917 = vld [vmem:[%s461 + $0x560] sm:$0xf]
        %v918 = vld [vmem:[%s461 + $0x564] sm:$0xf]
        %v919 = vld [vmem:[%s461 + $0x568] sm:$0xf]
        %v920 = vld [vmem:[%s461 + $0x56c] sm:$0xf]
        %v921 = vld [vmem:[%s461 + $0x570] sm:$0xf]
        %v922 = vld [vmem:[%s461 + $0x574] sm:$0xf]
        %v923 = vld [vmem:[%s461 + $0x578] sm:$0xf]
        %v924 = vld [vmem:[%s461 + $0x57c] sm:$0xf]
        %v925 = vld [vmem:[%s461 + $0x580] sm:$0xf]
        %v926 = vld [vmem:[%s461 + $0x584] sm:$0xf]
        %v927 = vld [vmem:[%s461 + $0x588] sm:$0xf]
        %v928 = vld [vmem:[%s461 + $0x58c] sm:$0xf]
        %v929 = vld [vmem:[%s461 + $0x590] sm:$0xf]
        %v930 = vld [vmem:[%s461 + $0x594] sm:$0xf]
        %v931 = vld [vmem:[%s461 + $0x598] sm:$0xf]
        %v932 = vld [vmem:[%s461 + $0x59c] sm:$0xf]
        %v933 = vld [vmem:[%s461 + $0x5a0] sm:$0xf]
        %v934 = vld [vmem:[%s461 + $0x5a4] sm:$0xf]
        %v935 = vld [vmem:[%s461 + $0x5a8] sm:$0xf]
        %v936 = vld [vmem:[%s461 + $0x5ac] sm:$0xf]
        %v937 = vld [vmem:[%s461 + $0x5b0] sm:$0xf]
        %v938 = vld [vmem:[%s461 + $0x5b4] sm:$0xf]
        %v939 = vld [vmem:[%s461 + $0x5b8] sm:$0xf]
        %v940 = vld [vmem:[%s461 + $0x5bc] sm:$0xf]
        %v941 = vld [vmem:[%s461 + $0x5c0] sm:$0xf]
        %v942 = vld [vmem:[%s461 + $0x5c4] sm:$0xf]
        %v943 = vld [vmem:[%s461 + $0x5c8] sm:$0xf]
        %v944 = vld [vmem:[%s461 + $0x5cc] sm:$0xf]
        %v945 = vld [vmem:[%s461 + $0x5d0] sm:$0xf]
        %v946 = vld [vmem:[%s461 + $0x5d4] sm:$0xf]
        %v947 = vld [vmem:[%s461 + $0x5d8] sm:$0xf]
        %v948 = vld [vmem:[%s461 + $0x5dc] sm:$0xf]
        %v949 = vld [vmem:[%s461 + $0x5e0] sm:$0xf]
        %v950 = vld [vmem:[%s461 + $0x5e4] sm:$0xf]
        %v951 = vld [vmem:[%s461 + $0x5e8] sm:$0xf]
        %v952 = vld [vmem:[%s461 + $0x5ec] sm:$0xf]
        %v953 = vld [vmem:[%s461 + $0x5f0] sm:$0xf]
        %v954 = vld [vmem:[%s461 + $0x5f4] sm:$0xf]
        %v955 = vld [vmem:[%s461 + $0x5f8] sm:$0xf]
        %v956 = vld [vmem:[%s461 + $0x5fc] sm:$0xf]
        %v957 = vld [vmem:[%s461 + $0x600] sm:$0xf]
        %v958 = vld [vmem:[%s461 + $0x604] sm:$0xf]
        %v959 = vld [vmem:[%s461 + $0x608] sm:$0xf]
        %v960 = vld [vmem:[%s461 + $0x60c] sm:$0xf]
        %v961 = vld [vmem:[%s461 + $0x610] sm:$0xf]
        %v962 = vld [vmem:[%s461 + $0x614] sm:$0xf]
        %v963 = vld [vmem:[%s461 + $0x618] sm:$0xf]
        %v964 = vld [vmem:[%s461 + $0x61c] sm:$0xf]
        %v965 = vld [vmem:[%s461 + $0x620] sm:$0xf]
        %v966 = vld [vmem:[%s461 + $0x624] sm:$0xf]
        %v967 = vld [vmem:[%s461 + $0x628] sm:$0xf]
        %v968 = vld [vmem:[%s461 + $0x62c] sm:$0xf]
        %v969 = vld [vmem:[%s461 + $0x630] sm:$0xf]
        %v970 = vld [vmem:[%s461 + $0x634] sm:$0xf]
        %v971 = vld [vmem:[%s461 + $0x638] sm:$0xf]
        %v972 = vld [vmem:[%s461 + $0x63c] sm:$0xf]
        %v973 = vld [vmem:[%s461 + $0x640] sm:$0xf]
        %v974 = vld [vmem:[%s461 + $0x644] sm:$0xf]
        %v975 = vld [vmem:[%s461 + $0x648] sm:$0xf]
        %v976 = vld [vmem:[%s461 + $0x64c] sm:$0xf]
        %v977 = vld [vmem:[%s461 + $0x650] sm:$0xf]
        %v978 = vld [vmem:[%s461 + $0x654] sm:$0xf]
        %v979 = vld [vmem:[%s461 + $0x658] sm:$0xf]
        %v980 = vld [vmem:[%s461 + $0x65c] sm:$0xf]
        %v981 = vld [vmem:[%s461 + $0x660] sm:$0xf]
        %v982 = vld [vmem:[%s461 + $0x664] sm:$0xf]
        %v983 = vld [vmem:[%s461 + $0x668] sm:$0xf]
        %v984 = vld [vmem:[%s461 + $0x66c] sm:$0xf]
        %v985 = vld [vmem:[%s461 + $0x670] sm:$0xf]
        %v986 = vld [vmem:[%s461 + $0x674] sm:$0xf]
        %v987 = vld [vmem:[%s461 + $0x678] sm:$0xf]
        %v988 = vld [vmem:[%s461 + $0x67c] sm:$0xf]
        %v989 = vld [vmem:[%s461 + $0x680] sm:$0xf]
        %v990 = vld [vmem:[%s461 + $0x684] sm:$0xf]
        %v991 = vld [vmem:[%s461 + $0x688] sm:$0xf]
        %v992 = vld [vmem:[%s461 + $0x68c] sm:$0xf]
        %v993 = vld [vmem:[%s461 + $0x690] sm:$0xf]
        %v994 = vld [vmem:[%s461 + $0x694] sm:$0xf]
        %v995 = vld [vmem:[%s461 + $0x698] sm:$0xf]
        %v996 = vld [vmem:[%s461 + $0x69c] sm:$0xf]
        %v997 = vld [vmem:[%s461 + $0x6a0] sm:$0xf]
        %v998 = vld [vmem:[%s461 + $0x6a4] sm:$0xf]
        %v999 = vld [vmem:[%s461 + $0x6a8] sm:$0xf]
        %v1000 = vld [vmem:[%s461 + $0x6ac] sm:$0xf]
        %v1001 = vld [vmem:[%s461 + $0x6b0] sm:$0xf]
        %v1002 = vld [vmem:[%s461 + $0x6b4] sm:$0xf]
        %v1003 = vld [vmem:[%s461 + $0x6b8] sm:$0xf]
        %v1004 = vld [vmem:[%s461 + $0x6bc] sm:$0xf]
        %v1005 = vld [vmem:[%s461 + $0x6c0] sm:$0xf]
        %v1006 = vld [vmem:[%s461 + $0x6c4] sm:$0xf]
        %v1007 = vld [vmem:[%s461 + $0x6c8] sm:$0xf]
        %v1008 = vld [vmem:[%s461 + $0x6cc] sm:$0xf]
        %v1009 = vld [vmem:[%s461 + $0x6d0] sm:$0xf]
        %v1010 = vld [vmem:[%s461 + $0x6d4] sm:$0xf]
        %v1011 = vld [vmem:[%s461 + $0x6d8] sm:$0xf]
        %v1012 = vld [vmem:[%s461 + $0x6dc] sm:$0xf]
        %v1013 = vld [vmem:[%s461 + $0x6e0] sm:$0xf]
        %v1014 = vld [vmem:[%s461 + $0x6e4] sm:$0xf]
        %v1015 = vld [vmem:[%s461 + $0x6e8] sm:$0xf]
        %v1016 = vld [vmem:[%s461 + $0x6ec] sm:$0xf]
        %v1017 = vld [vmem:[%s461 + $0x6f0] sm:$0xf]
        %v1018 = vld [vmem:[%s461 + $0x6f4] sm:$0xf]
        %v1019 = vld [vmem:[%s461 + $0x6f8] sm:$0xf]
        %v1020 = vld [vmem:[%s461 + $0x6fc] sm:$0xf]
        %v1021 = vld [vmem:[%s461 + $0x700] sm:$0xf]
        %v1022 = vld [vmem:[%s461 + $0x704] sm:$0xf]
        %v1023 = vld [vmem:[%s461 + $0x708] sm:$0xf]
        %v1024 = vld [vmem:[%s461 + $0x70c] sm:$0xf]
        %v1025 = vld [vmem:[%s461 + $0x710] sm:$0xf]
        %v1026 = vld [vmem:[%s461 + $0x714] sm:$0xf]
        %v1027 = vld [vmem:[%s461 + $0x718] sm:$0xf]
        %v1028 = vld [vmem:[%s461 + $0x71c] sm:$0xf]
        %v1029 = vld [vmem:[%s461 + $0x720] sm:$0xf]
        %v1030 = vld [vmem:[%s461 + $0x724] sm:$0xf]
        %v1031 = vld [vmem:[%s461 + $0x728] sm:$0xf]
        %v1032 = vld [vmem:[%s461 + $0x72c] sm:$0xf]
        %v1033 = vld [vmem:[%s461 + $0x730] sm:$0xf]
        %v1034 = vld [vmem:[%s461 + $0x734] sm:$0xf]
        %v1035 = vld [vmem:[%s461 + $0x738] sm:$0xf]
        %v1036 = vld [vmem:[%s461 + $0x73c] sm:$0xf]
        %v1037 = vld [vmem:[%s461 + $0x740] sm:$0xf]
        %v1038 = vld [vmem:[%s461 + $0x744] sm:$0xf]
        %v1039 = vld [vmem:[%s461 + $0x748] sm:$0xf]
        %v1040 = vld [vmem:[%s461 + $0x74c] sm:$0xf]
        %v1041 = vld [vmem:[%s461 + $0x750] sm:$0xf]
        %v1042 = vld [vmem:[%s461 + $0x754] sm:$0xf]
        %v1043 = vld [vmem:[%s461 + $0x758] sm:$0xf]
        %v1044 = vld [vmem:[%s461 + $0x75c] sm:$0xf]
        %v1045 = vld [vmem:[%s461 + $0x760] sm:$0xf]
        %v1046 = vld [vmem:[%s461 + $0x764] sm:$0xf]
        %v1047 = vld [vmem:[%s461 + $0x768] sm:$0xf]
        %v1048 = vld [vmem:[%s461 + $0x76c] sm:$0xf]
        %v1049 = vld [vmem:[%s461 + $0x770] sm:$0xf]
        %v1050 = vld [vmem:[%s461 + $0x774] sm:$0xf]
        %v1051 = vld [vmem:[%s461 + $0x778] sm:$0xf]
        %v1052 = vld [vmem:[%s461 + $0x77c] sm:$0xf]
        %v1053 = vld [vmem:[%s461 + $0x780] sm:$0xf]
        %v1054 = vld [vmem:[%s461 + $0x784] sm:$0xf]
        %v1055 = vld [vmem:[%s461 + $0x788] sm:$0xf]
        %v1056 = vld [vmem:[%s461 + $0x78c] sm:$0xf]
        %v1057 = vld [vmem:[%s461 + $0x790] sm:$0xf]
        %v1058 = vld [vmem:[%s461 + $0x794] sm:$0xf]
        %v1059 = vld [vmem:[%s461 + $0x798] sm:$0xf]
        %v1060 = vld [vmem:[%s461 + $0x79c] sm:$0xf]
        %v1061 = vld [vmem:[%s461 + $0x7a0] sm:$0xf]
        %v1062 = vld [vmem:[%s461 + $0x7a4] sm:$0xf]
        %v1063 = vld [vmem:[%s461 + $0x7a8] sm:$0xf]
        %v1064 = vld [vmem:[%s461 + $0x7ac] sm:$0xf]
        %v1065 = vld [vmem:[%s461 + $0x7b0] sm:$0xf]
        %v1066 = vld [vmem:[%s461 + $0x7b4] sm:$0xf]
        %v1067 = vld [vmem:[%s461 + $0x7b8] sm:$0xf]
        %v1068 = vld [vmem:[%s461 + $0x7bc] sm:$0xf]
        %v1069 = vld [vmem:[%s461 + $0x7c0] sm:$0xf]
        %v1070 = vld [vmem:[%s461 + $0x7c4] sm:$0xf]
        %v1071 = vld [vmem:[%s461 + $0x7c8] sm:$0xf]
        %v1072 = vld [vmem:[%s461 + $0x7cc] sm:$0xf]
        %v1073 = vld [vmem:[%s461 + $0x7d0] sm:$0xf]
        %v1074 = vld [vmem:[%s461 + $0x7d4] sm:$0xf]
        %v1075 = vld [vmem:[%s461 + $0x7d8] sm:$0xf]
        %v1076 = vld [vmem:[%s461 + $0x7dc] sm:$0xf]
        %v1077 = vld [vmem:[%s461 + $0x7e0] sm:$0xf]
        %v1078 = vld [vmem:[%s461 + $0x7e4] sm:$0xf]
        %v1079 = vld [vmem:[%s461 + $0x7e8] sm:$0xf]
        %v1080 = vld [vmem:[%s461 + $0x7ec] sm:$0xf]
        %v1081 = vld [vmem:[%s461 + $0x7f0] sm:$0xf]
        %v1082 = vld [vmem:[%s461 + $0x7f4] sm:$0xf]
        %v1083 = vld [vmem:[%s461 + $0x7f8] sm:$0xf]
        %v1084 = vld [vmem:[%s461 + $0x7fc] sm:$0xf]
        %v1597 = vunpack.c.l.b16 %v573
        %v1598 = vunpack.c.l.b16 %v574
        %v1599 = vunpack.c.l.b16 %v575
        %v1600 = vunpack.c.l.b16 %v576
        %v1601 = vunpack.c.l.b16 %v577
        %v1602 = vunpack.c.l.b16 %v578
        %v1603 = vunpack.c.l.b16 %v579
        %v1604 = vunpack.c.l.b16 %v580
        %v1605 = vunpack.c.l.b16 %v581
        %v1606 = vunpack.c.l.b16 %v582
        %v1607 = vunpack.c.l.b16 %v583
        %v1608 = vunpack.c.l.b16 %v584
        %v1609 = vunpack.c.l.b16 %v585
        %v1610 = vunpack.c.l.b16 %v586
        %v1611 = vunpack.c.l.b16 %v587
        %v1612 = vunpack.c.l.b16 %v588
        %v1613 = vunpack.c.l.b16 %v589
        %v1614 = vunpack.c.l.b16 %v590
        %v1615 = vunpack.c.l.b16 %v591
        %v1616 = vunpack.c.l.b16 %v592
        %v1617 = vunpack.c.l.b16 %v593
        %v1618 = vunpack.c.l.b16 %v594
        %v1619 = vunpack.c.l.b16 %v595
        %v1620 = vunpack.c.l.b16 %v596
        %v1621 = vunpack.c.l.b16 %v597
        %v1622 = vunpack.c.l.b16 %v598
        %v1623 = vunpack.c.l.b16 %v599
        %v1624 = vunpack.c.l.b16 %v600
        %v1625 = vunpack.c.l.b16 %v601
        %v1626 = vunpack.c.l.b16 %v602
        %v1627 = vunpack.c.l.b16 %v603
        %v1628 = vunpack.c.l.b16 %v604
        %v1629 = vunpack.c.l.b16 %v605
        %v1630 = vunpack.c.l.b16 %v606
        %v1631 = vunpack.c.l.b16 %v607
        %v1632 = vunpack.c.l.b16 %v608
        %v1633 = vunpack.c.l.b16 %v609
        %v1634 = vunpack.c.l.b16 %v610
        %v1635 = vunpack.c.l.b16 %v611
        %v1636 = vunpack.c.l.b16 %v612
        %v1637 = vunpack.c.l.b16 %v613
        %v1638 = vunpack.c.l.b16 %v614
        %v1639 = vunpack.c.l.b16 %v615
        %v1640 = vunpack.c.l.b16 %v616
        %v1641 = vunpack.c.l.b16 %v617
        %v1642 = vunpack.c.l.b16 %v618
        %v1643 = vunpack.c.l.b16 %v619
        %v1644 = vunpack.c.l.b16 %v620
        %v1645 = vunpack.c.l.b16 %v621
        %v1646 = vunpack.c.l.b16 %v622
        %v1647 = vunpack.c.l.b16 %v623
        %v1648 = vunpack.c.l.b16 %v624
        %v1649 = vunpack.c.l.b16 %v625
        %v1650 = vunpack.c.l.b16 %v626
        %v1651 = vunpack.c.l.b16 %v627
        %v1652 = vunpack.c.l.b16 %v628
        %v1653 = vunpack.c.l.b16 %v629
        %v1654 = vunpack.c.l.b16 %v630
        %v1655 = vunpack.c.l.b16 %v631
        %v1656 = vunpack.c.l.b16 %v632
        %v1657 = vunpack.c.l.b16 %v633
        %v1658 = vunpack.c.l.b16 %v634
        %v1659 = vunpack.c.l.b16 %v635
        %v1660 = vunpack.c.l.b16 %v636
        %v1661 = vunpack.c.l.b16 %v637
        %v1662 = vunpack.c.l.b16 %v638
        %v1663 = vunpack.c.l.b16 %v639
        %v1664 = vunpack.c.l.b16 %v640
        %v1665 = vunpack.c.l.b16 %v641
        %v1666 = vunpack.c.l.b16 %v642
        %v1667 = vunpack.c.l.b16 %v643
        %v1668 = vunpack.c.l.b16 %v644
        %v1669 = vunpack.c.l.b16 %v645
        %v1670 = vunpack.c.l.b16 %v646
        %v1671 = vunpack.c.l.b16 %v647
        %v1672 = vunpack.c.l.b16 %v648
        %v1673 = vunpack.c.l.b16 %v649
        %v1674 = vunpack.c.l.b16 %v650
        %v1675 = vunpack.c.l.b16 %v651
        %v1676 = vunpack.c.l.b16 %v652
        %v1677 = vunpack.c.l.b16 %v653
        %v1678 = vunpack.c.l.b16 %v654
        %v1679 = vunpack.c.l.b16 %v655
        %v1680 = vunpack.c.l.b16 %v656
        %v1681 = vunpack.c.l.b16 %v657
        %v1682 = vunpack.c.l.b16 %v658
        %v1683 = vunpack.c.l.b16 %v659
        %v1684 = vunpack.c.l.b16 %v660
        %v1685 = vunpack.c.l.b16 %v661
        %v1686 = vunpack.c.l.b16 %v662
        %v1687 = vunpack.c.l.b16 %v663
        %v1688 = vunpack.c.l.b16 %v664
        %v1689 = vunpack.c.l.b16 %v665
        %v1690 = vunpack.c.l.b16 %v666
        %v1691 = vunpack.c.l.b16 %v667
        %v1692 = vunpack.c.l.b16 %v668
        %v1693 = vunpack.c.l.b16 %v669
        %v1694 = vunpack.c.l.b16 %v670
        %v1695 = vunpack.c.l.b16 %v671
        %v1696 = vunpack.c.l.b16 %v672
        %v1697 = vunpack.c.l.b16 %v673
        %v1698 = vunpack.c.l.b16 %v674
        %v1699 = vunpack.c.l.b16 %v675
        %v1700 = vunpack.c.l.b16 %v676
        %v1701 = vunpack.c.l.b16 %v677
        %v1702 = vunpack.c.l.b16 %v678
        %v1703 = vunpack.c.l.b16 %v679
        %v1704 = vunpack.c.l.b16 %v680
        %v1705 = vunpack.c.l.b16 %v681
        %v1706 = vunpack.c.l.b16 %v682
        %v1707 = vunpack.c.l.b16 %v683
        %v1708 = vunpack.c.l.b16 %v684
        %v1709 = vunpack.c.l.b16 %v685
        %v1710 = vunpack.c.l.b16 %v686
        %v1711 = vunpack.c.l.b16 %v687
        %v1712 = vunpack.c.l.b16 %v688
        %v1713 = vunpack.c.l.b16 %v689
        %v1714 = vunpack.c.l.b16 %v690
        %v1715 = vunpack.c.l.b16 %v691
        %v1716 = vunpack.c.l.b16 %v692
        %v1717 = vunpack.c.l.b16 %v693
        %v1718 = vunpack.c.l.b16 %v694
        %v1719 = vunpack.c.l.b16 %v695
        %v1720 = vunpack.c.l.b16 %v696
        %v1721 = vunpack.c.l.b16 %v697
        %v1722 = vunpack.c.l.b16 %v698
        %v1723 = vunpack.c.l.b16 %v699
        %v1724 = vunpack.c.l.b16 %v700
        %v1725 = vunpack.c.l.b16 %v701
        %v1726 = vunpack.c.l.b16 %v702
        %v1727 = vunpack.c.l.b16 %v703
        %v1728 = vunpack.c.l.b16 %v704
        %v1729 = vunpack.c.l.b16 %v705
        %v1730 = vunpack.c.l.b16 %v706
        %v1731 = vunpack.c.l.b16 %v707
        %v1732 = vunpack.c.l.b16 %v708
        %v1733 = vunpack.c.l.b16 %v709
        %v1734 = vunpack.c.l.b16 %v710
        %v1735 = vunpack.c.l.b16 %v711
        %v1736 = vunpack.c.l.b16 %v712
        %v1737 = vunpack.c.l.b16 %v713
        %v1738 = vunpack.c.l.b16 %v714
        %v1739 = vunpack.c.l.b16 %v715
        %v1740 = vunpack.c.l.b16 %v716
        %v1741 = vunpack.c.l.b16 %v717
        %v1742 = vunpack.c.l.b16 %v718
        %v1743 = vunpack.c.l.b16 %v719
        %v1744 = vunpack.c.l.b16 %v720
        %v1745 = vunpack.c.l.b16 %v721
        %v1746 = vunpack.c.l.b16 %v722
        %v1747 = vunpack.c.l.b16 %v723
        %v1748 = vunpack.c.l.b16 %v724
        %v1749 = vunpack.c.l.b16 %v725
        %v1750 = vunpack.c.l.b16 %v726
        %v1751 = vunpack.c.l.b16 %v727
        %v1752 = vunpack.c.l.b16 %v728
        %v1753 = vunpack.c.l.b16 %v729
        %v1754 = vunpack.c.l.b16 %v730
        %v1755 = vunpack.c.l.b16 %v731
        %v1756 = vunpack.c.l.b16 %v732
        %v1757 = vunpack.c.l.b16 %v733
        %v1758 = vunpack.c.l.b16 %v734
        %v1759 = vunpack.c.l.b16 %v735
        %v1760 = vunpack.c.l.b16 %v736
        %v1761 = vunpack.c.l.b16 %v737
        %v1762 = vunpack.c.l.b16 %v738
        %v1763 = vunpack.c.l.b16 %v739
        %v1764 = vunpack.c.l.b16 %v740
        %v1765 = vunpack.c.l.b16 %v741
        %v1766 = vunpack.c.l.b16 %v742
        %v1767 = vunpack.c.l.b16 %v743
        %v1768 = vunpack.c.l.b16 %v744
        %v1769 = vunpack.c.l.b16 %v745
        %v1770 = vunpack.c.l.b16 %v746
        %v1771 = vunpack.c.l.b16 %v747
        %v1772 = vunpack.c.l.b16 %v748
        %v1773 = vunpack.c.l.b16 %v749
        %v1774 = vunpack.c.l.b16 %v750
        %v1775 = vunpack.c.l.b16 %v751
        %v1776 = vunpack.c.l.b16 %v752
        %v1777 = vunpack.c.l.b16 %v753
        %v1778 = vunpack.c.l.b16 %v754
        %v1779 = vunpack.c.l.b16 %v755
        %v1780 = vunpack.c.l.b16 %v756
        %v1781 = vunpack.c.l.b16 %v757
        %v1782 = vunpack.c.l.b16 %v758
        %v1783 = vunpack.c.l.b16 %v759
        %v1784 = vunpack.c.l.b16 %v760
        %v1785 = vunpack.c.l.b16 %v761
        %v1786 = vunpack.c.l.b16 %v762
        %v1787 = vunpack.c.l.b16 %v763
        %v1788 = vunpack.c.l.b16 %v764
        %v1789 = vunpack.c.l.b16 %v765
        %v1790 = vunpack.c.l.b16 %v766
        %v1791 = vunpack.c.l.b16 %v767
        %v1792 = vunpack.c.l.b16 %v768
        %v1793 = vunpack.c.l.b16 %v769
        %v1794 = vunpack.c.l.b16 %v770
        %v1795 = vunpack.c.l.b16 %v771
        %v1796 = vunpack.c.l.b16 %v772
        %v1797 = vunpack.c.l.b16 %v773
        %v1798 = vunpack.c.l.b16 %v774
        %v1799 = vunpack.c.l.b16 %v775
        %v1800 = vunpack.c.l.b16 %v776
        %v1801 = vunpack.c.l.b16 %v777
        %v1802 = vunpack.c.l.b16 %v778
        %v1803 = vunpack.c.l.b16 %v779
        %v1804 = vunpack.c.l.b16 %v780
        %v1805 = vunpack.c.l.b16 %v781
        %v1806 = vunpack.c.l.b16 %v782
        %v1807 = vunpack.c.l.b16 %v783
        %v1808 = vunpack.c.l.b16 %v784
        %v1809 = vunpack.c.l.b16 %v785
        %v1810 = vunpack.c.l.b16 %v786
        %v1811 = vunpack.c.l.b16 %v787
        %v1812 = vunpack.c.l.b16 %v788
        %v1813 = vunpack.c.l.b16 %v789
        %v1814 = vunpack.c.l.b16 %v790
        %v1815 = vunpack.c.l.b16 %v791
        %v1816 = vunpack.c.l.b16 %v792
        %v1817 = vunpack.c.l.b16 %v793
        %v1818 = vunpack.c.l.b16 %v794
        %v1819 = vunpack.c.l.b16 %v795
        %v1820 = vunpack.c.l.b16 %v796
        %v1821 = vunpack.c.l.b16 %v797
        %v1822 = vunpack.c.l.b16 %v798
        %v1823 = vunpack.c.l.b16 %v799
        %v1824 = vunpack.c.l.b16 %v800
        %v1825 = vunpack.c.l.b16 %v801
        %v1826 = vunpack.c.l.b16 %v802
        %v1827 = vunpack.c.l.b16 %v803
        %v1828 = vunpack.c.l.b16 %v804
        %v1829 = vunpack.c.l.b16 %v805
        %v1830 = vunpack.c.l.b16 %v806
        %v1831 = vunpack.c.l.b16 %v807
        %v1832 = vunpack.c.l.b16 %v808
        %v1833 = vunpack.c.l.b16 %v809
        %v1834 = vunpack.c.l.b16 %v810
        %v1835 = vunpack.c.l.b16 %v811
        %v1836 = vunpack.c.l.b16 %v812
        %v1837 = vunpack.c.l.b16 %v813
        %v1838 = vunpack.c.l.b16 %v814
        %v1839 = vunpack.c.l.b16 %v815
        %v1840 = vunpack.c.l.b16 %v816
        %v1841 = vunpack.c.l.b16 %v817
        %v1842 = vunpack.c.l.b16 %v818
        %v1843 = vunpack.c.l.b16 %v819
        %v1844 = vunpack.c.l.b16 %v820
        %v1845 = vunpack.c.l.b16 %v821
        %v1846 = vunpack.c.l.b16 %v822
        %v1847 = vunpack.c.l.b16 %v823
        %v1848 = vunpack.c.l.b16 %v824
        %v1849 = vunpack.c.l.b16 %v825
        %v1850 = vunpack.c.l.b16 %v826
        %v1851 = vunpack.c.l.b16 %v827
        %v1852 = vunpack.c.l.b16 %v828
        %v1853 = vunpack.c.l.b16 %v829
        %v1854 = vunpack.c.l.b16 %v830
        %v1855 = vunpack.c.l.b16 %v831
        %v1856 = vunpack.c.l.b16 %v832
        %v1857 = vunpack.c.l.b16 %v833
        %v1858 = vunpack.c.l.b16 %v834
        %v1859 = vunpack.c.l.b16 %v835
        %v1860 = vunpack.c.l.b16 %v836
        %v1861 = vunpack.c.l.b16 %v837
        %v1862 = vunpack.c.l.b16 %v838
        %v1863 = vunpack.c.l.b16 %v839
        %v1864 = vunpack.c.l.b16 %v840
        %v1865 = vunpack.c.l.b16 %v841
        %v1866 = vunpack.c.l.b16 %v842
        %v1867 = vunpack.c.l.b16 %v843
        %v1868 = vunpack.c.l.b16 %v844
        %v1869 = vunpack.c.l.b16 %v845
        %v1870 = vunpack.c.l.b16 %v846
        %v1871 = vunpack.c.l.b16 %v847
        %v1872 = vunpack.c.l.b16 %v848
        %v1873 = vunpack.c.l.b16 %v849
        %v1874 = vunpack.c.l.b16 %v850
        %v1875 = vunpack.c.l.b16 %v851
        %v1876 = vunpack.c.l.b16 %v852
        %v1877 = vunpack.c.l.b16 %v853
        %v1878 = vunpack.c.l.b16 %v854
        %v1879 = vunpack.c.l.b16 %v855
        %v1880 = vunpack.c.l.b16 %v856
        %v1881 = vunpack.c.l.b16 %v857
        %v1882 = vunpack.c.l.b16 %v858
        %v1883 = vunpack.c.l.b16 %v859
        %v1884 = vunpack.c.l.b16 %v860
        %v1885 = vunpack.c.l.b16 %v861
        %v1886 = vunpack.c.l.b16 %v862
        %v1887 = vunpack.c.l.b16 %v863
        %v1888 = vunpack.c.l.b16 %v864
        %v1889 = vunpack.c.l.b16 %v865
        %v1890 = vunpack.c.l.b16 %v866
        %v1891 = vunpack.c.l.b16 %v867
        %v1892 = vunpack.c.l.b16 %v868
        %v1893 = vunpack.c.l.b16 %v869
        %v1894 = vunpack.c.l.b16 %v870
        %v1895 = vunpack.c.l.b16 %v871
        %v1896 = vunpack.c.l.b16 %v872
        %v1897 = vunpack.c.l.b16 %v873
        %v1898 = vunpack.c.l.b16 %v874
        %v1899 = vunpack.c.l.b16 %v875
        %v1900 = vunpack.c.l.b16 %v876
        %v1901 = vunpack.c.l.b16 %v877
        %v1902 = vunpack.c.l.b16 %v878
        %v1903 = vunpack.c.l.b16 %v879
        %v1904 = vunpack.c.l.b16 %v880
        %v1905 = vunpack.c.l.b16 %v881
        %v1906 = vunpack.c.l.b16 %v882
        %v1907 = vunpack.c.l.b16 %v883
        %v1908 = vunpack.c.l.b16 %v884
        %v1909 = vunpack.c.l.b16 %v885
        %v1910 = vunpack.c.l.b16 %v886
        %v1911 = vunpack.c.l.b16 %v887
        %v1912 = vunpack.c.l.b16 %v888
        %v1913 = vunpack.c.l.b16 %v889
        %v1914 = vunpack.c.l.b16 %v890
        %v1915 = vunpack.c.l.b16 %v891
        %v1916 = vunpack.c.l.b16 %v892
        %v1917 = vunpack.c.l.b16 %v893
        %v1918 = vunpack.c.l.b16 %v894
        %v1919 = vunpack.c.l.b16 %v895
        %v1920 = vunpack.c.l.b16 %v896
        %v1921 = vunpack.c.l.b16 %v897
        %v1922 = vunpack.c.l.b16 %v898
        %v1923 = vunpack.c.l.b16 %v899
        %v1924 = vunpack.c.l.b16 %v900
        %v1925 = vunpack.c.l.b16 %v901
        %v1926 = vunpack.c.l.b16 %v902
        %v1927 = vunpack.c.l.b16 %v903
        %v1928 = vunpack.c.l.b16 %v904
        %v1929 = vunpack.c.l.b16 %v905
        %v1930 = vunpack.c.l.b16 %v906
        %v1931 = vunpack.c.l.b16 %v907
        %v1932 = vunpack.c.l.b16 %v908
        %v1933 = vunpack.c.l.b16 %v909
        %v1934 = vunpack.c.l.b16 %v910
        %v1935 = vunpack.c.l.b16 %v911
        %v1936 = vunpack.c.l.b16 %v912
        %v1937 = vunpack.c.l.b16 %v913
        %v1938 = vunpack.c.l.b16 %v914
        %v1939 = vunpack.c.l.b16 %v915
        %v1940 = vunpack.c.l.b16 %v916
        %v1941 = vunpack.c.l.b16 %v917
        %v1942 = vunpack.c.l.b16 %v918
        %v1943 = vunpack.c.l.b16 %v919
        %v1944 = vunpack.c.l.b16 %v920
        %v1945 = vunpack.c.l.b16 %v921
        %v1946 = vunpack.c.l.b16 %v922
        %v1947 = vunpack.c.l.b16 %v923
        %v1948 = vunpack.c.l.b16 %v924
        %v1949 = vunpack.c.l.b16 %v925
        %v1950 = vunpack.c.l.b16 %v926
        %v1951 = vunpack.c.l.b16 %v927
        %v1952 = vunpack.c.l.b16 %v928
        %v1953 = vunpack.c.l.b16 %v929
        %v1954 = vunpack.c.l.b16 %v930
        %v1955 = vunpack.c.l.b16 %v931
        %v1956 = vunpack.c.l.b16 %v932
        %v1957 = vunpack.c.l.b16 %v933
        %v1958 = vunpack.c.l.b16 %v934
        %v1959 = vunpack.c.l.b16 %v935
        %v1960 = vunpack.c.l.b16 %v936
        %v1961 = vunpack.c.l.b16 %v937
        %v1962 = vunpack.c.l.b16 %v938
        %v1963 = vunpack.c.l.b16 %v939
        %v1964 = vunpack.c.l.b16 %v940
        %v1965 = vunpack.c.l.b16 %v941
        %v1966 = vunpack.c.l.b16 %v942
        %v1967 = vunpack.c.l.b16 %v943
        %v1968 = vunpack.c.l.b16 %v944
        %v1969 = vunpack.c.l.b16 %v945
        %v1970 = vunpack.c.l.b16 %v946
        %v1971 = vunpack.c.l.b16 %v947
        %v1972 = vunpack.c.l.b16 %v948
        %v1973 = vunpack.c.l.b16 %v949
        %v1974 = vunpack.c.l.b16 %v950
        %v1975 = vunpack.c.l.b16 %v951
        %v1976 = vunpack.c.l.b16 %v952
        %v1977 = vunpack.c.l.b16 %v953
        %v1978 = vunpack.c.l.b16 %v954
        %v1979 = vunpack.c.l.b16 %v955
        %v1980 = vunpack.c.l.b16 %v956
        %v1981 = vunpack.c.l.b16 %v957
        %v1982 = vunpack.c.l.b16 %v958
        %v1983 = vunpack.c.l.b16 %v959
        %v1984 = vunpack.c.l.b16 %v960
        %v1985 = vunpack.c.l.b16 %v961
        %v1986 = vunpack.c.l.b16 %v962
        %v1987 = vunpack.c.l.b16 %v963
        %v1988 = vunpack.c.l.b16 %v964
        %v1989 = vunpack.c.l.b16 %v965
        %v1990 = vunpack.c.l.b16 %v966
        %v1991 = vunpack.c.l.b16 %v967
        %v1992 = vunpack.c.l.b16 %v968
        %v1993 = vunpack.c.l.b16 %v969
        %v1994 = vunpack.c.l.b16 %v970
        %v1995 = vunpack.c.l.b16 %v971
        %v1996 = vunpack.c.l.b16 %v972
        %v1997 = vunpack.c.l.b16 %v973
        %v1998 = vunpack.c.l.b16 %v974
        %v1999 = vunpack.c.l.b16 %v975
        %v2000 = vunpack.c.l.b16 %v976
        %v2001 = vunpack.c.l.b16 %v977
        %v2002 = vunpack.c.l.b16 %v978
        %v2003 = vunpack.c.l.b16 %v979
        %v2004 = vunpack.c.l.b16 %v980
        %v2005 = vunpack.c.l.b16 %v981
        %v2006 = vunpack.c.l.b16 %v982
        %v2007 = vunpack.c.l.b16 %v983
        %v2008 = vunpack.c.l.b16 %v984
        %v2009 = vunpack.c.l.b16 %v985
        %v2010 = vunpack.c.l.b16 %v986
        %v2011 = vunpack.c.l.b16 %v987
        %v2012 = vunpack.c.l.b16 %v988
        %v2013 = vunpack.c.l.b16 %v989
        %v2014 = vunpack.c.l.b16 %v990
        %v2015 = vunpack.c.l.b16 %v991
        %v2016 = vunpack.c.l.b16 %v992
        %v2017 = vunpack.c.l.b16 %v993
        %v2018 = vunpack.c.l.b16 %v994
        %v2019 = vunpack.c.l.b16 %v995
        %v2020 = vunpack.c.l.b16 %v996
        %v2021 = vunpack.c.l.b16 %v997
        %v2022 = vunpack.c.l.b16 %v998
        %v2023 = vunpack.c.l.b16 %v999
        %v2024 = vunpack.c.l.b16 %v1000
        %v2025 = vunpack.c.l.b16 %v1001
        %v2026 = vunpack.c.l.b16 %v1002
        %v2027 = vunpack.c.l.b16 %v1003
        %v2028 = vunpack.c.l.b16 %v1004
        %v2029 = vunpack.c.l.b16 %v1005
        %v2030 = vunpack.c.l.b16 %v1006
        %v2031 = vunpack.c.l.b16 %v1007
        %v2032 = vunpack.c.l.b16 %v1008
        %v2033 = vunpack.c.l.b16 %v1009
        %v2034 = vunpack.c.l.b16 %v1010
        %v2035 = vunpack.c.l.b16 %v1011
        %v2036 = vunpack.c.l.b16 %v1012
        %v2037 = vunpack.c.l.b16 %v1013
        %v2038 = vunpack.c.l.b16 %v1014
        %v2039 = vunpack.c.l.b16 %v1015
        %v2040 = vunpack.c.l.b16 %v1016
        %v2041 = vunpack.c.l.b16 %v1017
        %v2042 = vunpack.c.l.b16 %v1018
        %v2043 = vunpack.c.l.b16 %v1019
        %v2044 = vunpack.c.l.b16 %v1020
        %v2045 = vunpack.c.l.b16 %v1021
        %v2046 = vunpack.c.l.b16 %v1022
        %v2047 = vunpack.c.l.b16 %v1023
        %v2048 = vunpack.c.l.b16 %v1024
        %v2049 = vunpack.c.l.b16 %v1025
        %v2050 = vunpack.c.l.b16 %v1026
        %v2051 = vunpack.c.l.b16 %v1027
        %v2052 = vunpack.c.l.b16 %v1028
        %v2053 = vunpack.c.l.b16 %v1029
        %v2054 = vunpack.c.l.b16 %v1030
        %v2055 = vunpack.c.l.b16 %v1031
        %v2056 = vunpack.c.l.b16 %v1032
        %v2057 = vunpack.c.l.b16 %v1033
        %v2058 = vunpack.c.l.b16 %v1034
        %v2059 = vunpack.c.l.b16 %v1035
        %v2060 = vunpack.c.l.b16 %v1036
        %v2061 = vunpack.c.l.b16 %v1037
        %v2062 = vunpack.c.l.b16 %v1038
        %v2063 = vunpack.c.l.b16 %v1039
        %v2064 = vunpack.c.l.b16 %v1040
        %v2065 = vunpack.c.l.b16 %v1041
        %v2066 = vunpack.c.l.b16 %v1042
        %v2067 = vunpack.c.l.b16 %v1043
        %v2068 = vunpack.c.l.b16 %v1044
        %v2069 = vunpack.c.l.b16 %v1045
        %v2070 = vunpack.c.l.b16 %v1046
        %v2071 = vunpack.c.l.b16 %v1047
        %v2072 = vunpack.c.l.b16 %v1048
        %v2073 = vunpack.c.l.b16 %v1049
        %v2074 = vunpack.c.l.b16 %v1050
        %v2075 = vunpack.c.l.b16 %v1051
        %v2076 = vunpack.c.l.b16 %v1052
        %v2077 = vunpack.c.l.b16 %v1053
        %v2078 = vunpack.c.l.b16 %v1054
        %v2079 = vunpack.c.l.b16 %v1055
        %v2080 = vunpack.c.l.b16 %v1056
        %v2081 = vunpack.c.l.b16 %v1057
        %v2082 = vunpack.c.l.b16 %v1058
        %v2083 = vunpack.c.l.b16 %v1059
        %v2084 = vunpack.c.l.b16 %v1060
        %v2085 = vunpack.c.l.b16 %v1061
        %v2086 = vunpack.c.l.b16 %v1062
        %v2087 = vunpack.c.l.b16 %v1063
        %v2088 = vunpack.c.l.b16 %v1064
        %v2089 = vunpack.c.l.b16 %v1065
        %v2090 = vunpack.c.l.b16 %v1066
        %v2091 = vunpack.c.l.b16 %v1067
        %v2092 = vunpack.c.l.b16 %v1068
        %v2093 = vunpack.c.l.b16 %v1069
        %v2094 = vunpack.c.l.b16 %v1070
        %v2095 = vunpack.c.l.b16 %v1071
        %v2096 = vunpack.c.l.b16 %v1072
        %v2097 = vunpack.c.l.b16 %v1073
        %v2098 = vunpack.c.l.b16 %v1074
        %v2099 = vunpack.c.l.b16 %v1075
        %v2100 = vunpack.c.l.b16 %v1076
        %v2101 = vunpack.c.l.b16 %v1077
        %v2102 = vunpack.c.l.b16 %v1078
        %v2103 = vunpack.c.l.b16 %v1079
        %v2104 = vunpack.c.l.b16 %v1080
        %v2105 = vunpack.c.l.b16 %v1081
        %v2106 = vunpack.c.l.b16 %v1082
        %v2107 = vunpack.c.l.b16 %v1083
        %v2108 = vunpack.c.l.b16 %v1084
        %v2109 = vpack.c.b16 %v1598, %v1597
        %v2110 = vpack.c.b16 %v1600, %v1599
        %v2111 = vpack.c.b16 %v1602, %v1601
        %v2112 = vpack.c.b16 %v1604, %v1603
        %v2113 = vpack.c.b16 %v1606, %v1605
        %v2114 = vpack.c.b16 %v1608, %v1607
        %v2115 = vpack.c.b16 %v1610, %v1609
        %v2116 = vpack.c.b16 %v1612, %v1611
        %v2117 = vpack.c.b16 %v1614, %v1613
        %v2118 = vpack.c.b16 %v1616, %v1615
        %v2119 = vpack.c.b16 %v1618, %v1617
        %v2120 = vpack.c.b16 %v1620, %v1619
        %v2121 = vpack.c.b16 %v1622, %v1621
        %v2122 = vpack.c.b16 %v1624, %v1623
        %v2123 = vpack.c.b16 %v1626, %v1625
        %v2124 = vpack.c.b16 %v1628, %v1627
        %v2125 = vpack.c.b16 %v1630, %v1629
        %v2126 = vpack.c.b16 %v1632, %v1631
        %v2127 = vpack.c.b16 %v1634, %v1633
        %v2128 = vpack.c.b16 %v1636, %v1635
        %v2129 = vpack.c.b16 %v1638, %v1637
        %v2130 = vpack.c.b16 %v1640, %v1639
        %v2131 = vpack.c.b16 %v1642, %v1641
        %v2132 = vpack.c.b16 %v1644, %v1643
        %v2133 = vpack.c.b16 %v1646, %v1645
        %v2134 = vpack.c.b16 %v1648, %v1647
        %v2135 = vpack.c.b16 %v1650, %v1649
        %v2136 = vpack.c.b16 %v1652, %v1651
        %v2137 = vpack.c.b16 %v1654, %v1653
        %v2138 = vpack.c.b16 %v1656, %v1655
        %v2139 = vpack.c.b16 %v1658, %v1657
        %v2140 = vpack.c.b16 %v1660, %v1659
        %v2141 = vpack.c.b16 %v1662, %v1661
        %v2142 = vpack.c.b16 %v1664, %v1663
        %v2143 = vpack.c.b16 %v1666, %v1665
        %v2144 = vpack.c.b16 %v1668, %v1667
        %v2145 = vpack.c.b16 %v1670, %v1669
        %v2146 = vpack.c.b16 %v1672, %v1671
        %v2147 = vpack.c.b16 %v1674, %v1673
        %v2148 = vpack.c.b16 %v1676, %v1675
        %v2149 = vpack.c.b16 %v1678, %v1677
        %v2150 = vpack.c.b16 %v1680, %v1679
        %v2151 = vpack.c.b16 %v1682, %v1681
        %v2152 = vpack.c.b16 %v1684, %v1683
        %v2153 = vpack.c.b16 %v1686, %v1685
        %v2154 = vpack.c.b16 %v1688, %v1687
        %v2155 = vpack.c.b16 %v1690, %v1689
        %v2156 = vpack.c.b16 %v1692, %v1691
        %v2157 = vpack.c.b16 %v1694, %v1693
        %v2158 = vpack.c.b16 %v1696, %v1695
        %v2159 = vpack.c.b16 %v1698, %v1697
        %v2160 = vpack.c.b16 %v1700, %v1699
        %v2161 = vpack.c.b16 %v1702, %v1701
        %v2162 = vpack.c.b16 %v1704, %v1703
        %v2163 = vpack.c.b16 %v1706, %v1705
        %v2164 = vpack.c.b16 %v1708, %v1707
        %v2165 = vpack.c.b16 %v1710, %v1709
        %v2166 = vpack.c.b16 %v1712, %v1711
        %v2167 = vpack.c.b16 %v1714, %v1713
        %v2168 = vpack.c.b16 %v1716, %v1715
        %v2169 = vpack.c.b16 %v1718, %v1717
        %v2170 = vpack.c.b16 %v1720, %v1719
        %v2171 = vpack.c.b16 %v1722, %v1721
        %v2172 = vpack.c.b16 %v1724, %v1723
        %v2173 = vpack.c.b16 %v1726, %v1725
        %v2174 = vpack.c.b16 %v1728, %v1727
        %v2175 = vpack.c.b16 %v1730, %v1729
        %v2176 = vpack.c.b16 %v1732, %v1731
        %v2177 = vpack.c.b16 %v1734, %v1733
        %v2178 = vpack.c.b16 %v1736, %v1735
        %v2179 = vpack.c.b16 %v1738, %v1737
        %v2180 = vpack.c.b16 %v1740, %v1739
        %v2181 = vpack.c.b16 %v1742, %v1741
        %v2182 = vpack.c.b16 %v1744, %v1743
        %v2183 = vpack.c.b16 %v1746, %v1745
        %v2184 = vpack.c.b16 %v1748, %v1747
        %v2185 = vpack.c.b16 %v1750, %v1749
        %v2186 = vpack.c.b16 %v1752, %v1751
        %v2187 = vpack.c.b16 %v1754, %v1753
        %v2188 = vpack.c.b16 %v1756, %v1755
        %v2189 = vpack.c.b16 %v1758, %v1757
        %v2190 = vpack.c.b16 %v1760, %v1759
        %v2191 = vpack.c.b16 %v1762, %v1761
        %v2192 = vpack.c.b16 %v1764, %v1763
        %v2193 = vpack.c.b16 %v1766, %v1765
        %v2194 = vpack.c.b16 %v1768, %v1767
        %v2195 = vpack.c.b16 %v1770, %v1769
        %v2196 = vpack.c.b16 %v1772, %v1771
        %v2197 = vpack.c.b16 %v1774, %v1773
        %v2198 = vpack.c.b16 %v1776, %v1775
        %v2199 = vpack.c.b16 %v1778, %v1777
        %v2200 = vpack.c.b16 %v1780, %v1779
        %v2201 = vpack.c.b16 %v1782, %v1781
        %v2202 = vpack.c.b16 %v1784, %v1783
        %v2203 = vpack.c.b16 %v1786, %v1785
        %v2204 = vpack.c.b16 %v1788, %v1787
        %v2205 = vpack.c.b16 %v1790, %v1789
        %v2206 = vpack.c.b16 %v1792, %v1791
        %v2207 = vpack.c.b16 %v1794, %v1793
        %v2208 = vpack.c.b16 %v1796, %v1795
        %v2209 = vpack.c.b16 %v1798, %v1797
        %v2210 = vpack.c.b16 %v1800, %v1799
        %v2211 = vpack.c.b16 %v1802, %v1801
        %v2212 = vpack.c.b16 %v1804, %v1803
        %v2213 = vpack.c.b16 %v1806, %v1805
        %v2214 = vpack.c.b16 %v1808, %v1807
        %v2215 = vpack.c.b16 %v1810, %v1809
        %v2216 = vpack.c.b16 %v1812, %v1811
        %v2217 = vpack.c.b16 %v1814, %v1813
        %v2218 = vpack.c.b16 %v1816, %v1815
        %v2219 = vpack.c.b16 %v1818, %v1817
        %v2220 = vpack.c.b16 %v1820, %v1819
        %v2221 = vpack.c.b16 %v1822, %v1821
        %v2222 = vpack.c.b16 %v1824, %v1823
        %v2223 = vpack.c.b16 %v1826, %v1825
        %v2224 = vpack.c.b16 %v1828, %v1827
        %v2225 = vpack.c.b16 %v1830, %v1829
        %v2226 = vpack.c.b16 %v1832, %v1831
        %v2227 = vpack.c.b16 %v1834, %v1833
        %v2228 = vpack.c.b16 %v1836, %v1835
        %v2229 = vpack.c.b16 %v1838, %v1837
        %v2230 = vpack.c.b16 %v1840, %v1839
        %v2231 = vpack.c.b16 %v1842, %v1841
        %v2232 = vpack.c.b16 %v1844, %v1843
        %v2233 = vpack.c.b16 %v1846, %v1845
        %v2234 = vpack.c.b16 %v1848, %v1847
        %v2235 = vpack.c.b16 %v1850, %v1849
        %v2236 = vpack.c.b16 %v1852, %v1851
        %v2237 = vpack.c.b16 %v1854, %v1853
        %v2238 = vpack.c.b16 %v1856, %v1855
        %v2239 = vpack.c.b16 %v1858, %v1857
        %v2240 = vpack.c.b16 %v1860, %v1859
        %v2241 = vpack.c.b16 %v1862, %v1861
        %v2242 = vpack.c.b16 %v1864, %v1863
        %v2243 = vpack.c.b16 %v1866, %v1865
        %v2244 = vpack.c.b16 %v1868, %v1867
        %v2245 = vpack.c.b16 %v1870, %v1869
        %v2246 = vpack.c.b16 %v1872, %v1871
        %v2247 = vpack.c.b16 %v1874, %v1873
        %v2248 = vpack.c.b16 %v1876, %v1875
        %v2249 = vpack.c.b16 %v1878, %v1877
        %v2250 = vpack.c.b16 %v1880, %v1879
        %v2251 = vpack.c.b16 %v1882, %v1881
        %v2252 = vpack.c.b16 %v1884, %v1883
        %v2253 = vpack.c.b16 %v1886, %v1885
        %v2254 = vpack.c.b16 %v1888, %v1887
        %v2255 = vpack.c.b16 %v1890, %v1889
        %v2256 = vpack.c.b16 %v1892, %v1891
        %v2257 = vpack.c.b16 %v1894, %v1893
        %v2258 = vpack.c.b16 %v1896, %v1895
        %v2259 = vpack.c.b16 %v1898, %v1897
        %v2260 = vpack.c.b16 %v1900, %v1899
        %v2261 = vpack.c.b16 %v1902, %v1901
        %v2262 = vpack.c.b16 %v1904, %v1903
        %v2263 = vpack.c.b16 %v1906, %v1905
        %v2264 = vpack.c.b16 %v1908, %v1907
        %v2265 = vpack.c.b16 %v1910, %v1909
        %v2266 = vpack.c.b16 %v1912, %v1911
        %v2267 = vpack.c.b16 %v1914, %v1913
        %v2268 = vpack.c.b16 %v1916, %v1915
        %v2269 = vpack.c.b16 %v1918, %v1917
        %v2270 = vpack.c.b16 %v1920, %v1919
        %v2271 = vpack.c.b16 %v1922, %v1921
        %v2272 = vpack.c.b16 %v1924, %v1923
        %v2273 = vpack.c.b16 %v1926, %v1925
        %v2274 = vpack.c.b16 %v1928, %v1927
        %v2275 = vpack.c.b16 %v1930, %v1929
        %v2276 = vpack.c.b16 %v1932, %v1931
        %v2277 = vpack.c.b16 %v1934, %v1933
        %v2278 = vpack.c.b16 %v1936, %v1935
        %v2279 = vpack.c.b16 %v1938, %v1937
        %v2280 = vpack.c.b16 %v1940, %v1939
        %v2281 = vpack.c.b16 %v1942, %v1941
        %v2282 = vpack.c.b16 %v1944, %v1943
        %v2283 = vpack.c.b16 %v1946, %v1945
        %v2284 = vpack.c.b16 %v1948, %v1947
        %v2285 = vpack.c.b16 %v1950, %v1949
        %v2286 = vpack.c.b16 %v1952, %v1951
        %v2287 = vpack.c.b16 %v1954, %v1953
        %v2288 = vpack.c.b16 %v1956, %v1955
        %v2289 = vpack.c.b16 %v1958, %v1957
        %v2290 = vpack.c.b16 %v1960, %v1959
        %v2291 = vpack.c.b16 %v1962, %v1961
        %v2292 = vpack.c.b16 %v1964, %v1963
        %v2293 = vpack.c.b16 %v1966, %v1965
        %v2294 = vpack.c.b16 %v1968, %v1967
        %v2295 = vpack.c.b16 %v1970, %v1969
        %v2296 = vpack.c.b16 %v1972, %v1971
        %v2297 = vpack.c.b16 %v1974, %v1973
        %v2298 = vpack.c.b16 %v1976, %v1975
        %v2299 = vpack.c.b16 %v1978, %v1977
        %v2300 = vpack.c.b16 %v1980, %v1979
        %v2301 = vpack.c.b16 %v1982, %v1981
        %v2302 = vpack.c.b16 %v1984, %v1983
        %v2303 = vpack.c.b16 %v1986, %v1985
        %v2304 = vpack.c.b16 %v1988, %v1987
        %v2305 = vpack.c.b16 %v1990, %v1989
        %v2306 = vpack.c.b16 %v1992, %v1991
        %v2307 = vpack.c.b16 %v1994, %v1993
        %v2308 = vpack.c.b16 %v1996, %v1995
        %v2309 = vpack.c.b16 %v1998, %v1997
        %v2310 = vpack.c.b16 %v2000, %v1999
        %v2311 = vpack.c.b16 %v2002, %v2001
        %v2312 = vpack.c.b16 %v2004, %v2003
        %v2313 = vpack.c.b16 %v2006, %v2005
        %v2314 = vpack.c.b16 %v2008, %v2007
        %v2315 = vpack.c.b16 %v2010, %v2009
        %v2316 = vpack.c.b16 %v2012, %v2011
        %v2317 = vpack.c.b16 %v2014, %v2013
        %v2318 = vpack.c.b16 %v2016, %v2015
        %v2319 = vpack.c.b16 %v2018, %v2017
        %v2320 = vpack.c.b16 %v2020, %v2019
        %v2321 = vpack.c.b16 %v2022, %v2021
        %v2322 = vpack.c.b16 %v2024, %v2023
        %v2323 = vpack.c.b16 %v2026, %v2025
        %v2324 = vpack.c.b16 %v2028, %v2027
        %v2325 = vpack.c.b16 %v2030, %v2029
        %v2326 = vpack.c.b16 %v2032, %v2031
        %v2327 = vpack.c.b16 %v2034, %v2033
        %v2328 = vpack.c.b16 %v2036, %v2035
        %v2329 = vpack.c.b16 %v2038, %v2037
        %v2330 = vpack.c.b16 %v2040, %v2039
        %v2331 = vpack.c.b16 %v2042, %v2041
        %v2332 = vpack.c.b16 %v2044, %v2043
        %v2333 = vpack.c.b16 %v2046, %v2045
        %v2334 = vpack.c.b16 %v2048, %v2047
        %v2335 = vpack.c.b16 %v2050, %v2049
        %v2336 = vpack.c.b16 %v2052, %v2051
        %v2337 = vpack.c.b16 %v2054, %v2053
        %v2338 = vpack.c.b16 %v2056, %v2055
        %v2339 = vpack.c.b16 %v2058, %v2057
        %v2340 = vpack.c.b16 %v2060, %v2059
        %v2341 = vpack.c.b16 %v2062, %v2061
        %v2342 = vpack.c.b16 %v2064, %v2063
        %v2343 = vpack.c.b16 %v2066, %v2065
        %v2344 = vpack.c.b16 %v2068, %v2067
        %v2345 = vpack.c.b16 %v2070, %v2069
        %v2346 = vpack.c.b16 %v2072, %v2071
        %v2347 = vpack.c.b16 %v2074, %v2073
        %v2348 = vpack.c.b16 %v2076, %v2075
        %v2349 = vpack.c.b16 %v2078, %v2077
        %v2350 = vpack.c.b16 %v2080, %v2079
        %v2351 = vpack.c.b16 %v2082, %v2081
        %v2352 = vpack.c.b16 %v2084, %v2083
        %v2353 = vpack.c.b16 %v2086, %v2085
        %v2354 = vpack.c.b16 %v2088, %v2087
        %v2355 = vpack.c.b16 %v2090, %v2089
        %v2356 = vpack.c.b16 %v2092, %v2091
        %v2357 = vpack.c.b16 %v2094, %v2093
        %v2358 = vpack.c.b16 %v2096, %v2095
        %v2359 = vpack.c.b16 %v2098, %v2097
        %v2360 = vpack.c.b16 %v2100, %v2099
        %v2361 = vpack.c.b16 %v2102, %v2101
        %v2362 = vpack.c.b16 %v2104, %v2103
        %v2363 = vpack.c.b16 %v2106, %v2105
        %v2364 = vpack.c.b16 %v2108, %v2107
        %2621 = vmatpush.bf16.msra.mxu0 %v2116
        %2622 = vmatpush.bf16.msra.mxu0 %v2115
        %2623 = vmatpush.bf16.msra.mxu0 %v2114
        %2624 = vmatpush.bf16.msra.mxu0 %v2113
        %2625 = vmatpush.bf16.msra.mxu0 %v2112
        %2626 = vmatpush.bf16.msra.mxu0 %v2111
        %2627 = vmatpush.bf16.msra.mxu0 %v2110
        %2628 = vmatpush.bf16.msra.mxu0 %v2109
        %2629 = vmatmul.bf16.gmra.mxu0 %v541
        %v2630 = vpop.f32.mrf.mxu0
        %v2631 = vadd.f32 0.0, %v2630
        %v2632 = vpop.f32.mrf.mxu0
        %v2633 = vadd.f32 0.0, %v2632
        %2634 = vdwg.mxu0
        %2635 = vmatpush.bf16.msra.mxu0 %v2124
        %2636 = vmatpush.bf16.msra.mxu0 %v2123
        %2637 = vmatpush.bf16.msra.mxu0 %v2122
        %2638 = vmatpush.bf16.msra.mxu0 %v2121
        %2639 = vmatpush.bf16.msra.mxu0 %v2120
        %2640 = vmatpush.bf16.msra.mxu0 %v2119
        %2641 = vmatpush.bf16.msra.mxu0 %v2118
        %2642 = vmatpush.bf16.msra.mxu0 %v2117
        %2643 = vmatmul.bf16.gmra.mxu0 %v542
        %v2644 = vpop.f32.mrf.mxu0
        %v2645 = vadd.f32 %v2631, %v2644
        %v2646 = vpop.f32.mrf.mxu0
        %v2647 = vadd.f32 %v2633, %v2646
        %2648 = vdwg.mxu0
        %2649 = vmatpush.bf16.msra.mxu0 %v2132
        %2650 = vmatpush.bf16.msra.mxu0 %v2131
        %2651 = vmatpush.bf16.msra.mxu0 %v2130
        %2652 = vmatpush.bf16.msra.mxu0 %v2129
        %2653 = vmatpush.bf16.msra.mxu0 %v2128
        %2654 = vmatpush.bf16.msra.mxu0 %v2127
        %2655 = vmatpush.bf16.msra.mxu0 %v2126
        %2656 = vmatpush.bf16.msra.mxu0 %v2125
        %2657 = vmatmul.bf16.gmra.mxu0 %v543
        %v2658 = vpop.f32.mrf.mxu0
        %v2659 = vadd.f32 %v2645, %v2658
        %v2660 = vpop.f32.mrf.mxu0
        %v2661 = vadd.f32 %v2647, %v2660
        %2662 = vdwg.mxu0
        %2663 = vmatpush.bf16.msra.mxu0 %v2140
        %2664 = vmatpush.bf16.msra.mxu0 %v2139
        %2665 = vmatpush.bf16.msra.mxu0 %v2138
        %2666 = vmatpush.bf16.msra.mxu0 %v2137
        %2667 = vmatpush.bf16.msra.mxu0 %v2136
        %2668 = vmatpush.bf16.msra.mxu0 %v2135
        %2669 = vmatpush.bf16.msra.mxu0 %v2134
        %2670 = vmatpush.bf16.msra.mxu0 %v2133
        %2671 = vmatmul.bf16.gmra.mxu0 %v544
        %v2672 = vpop.f32.mrf.mxu0
        %v2673 = vadd.f32 %v2659, %v2672
        %v2674 = vpop.f32.mrf.mxu0
        %v2675 = vadd.f32 %v2661, %v2674
        %2676 = vdwg.mxu0
        %2677 = vmatpush.bf16.msra.mxu0 %v2148
        %2678 = vmatpush.bf16.msra.mxu0 %v2147
        %2679 = vmatpush.bf16.msra.mxu0 %v2146
        %2680 = vmatpush.bf16.msra.mxu0 %v2145
        %2681 = vmatpush.bf16.msra.mxu0 %v2144
        %2682 = vmatpush.bf16.msra.mxu0 %v2143
        %2683 = vmatpush.bf16.msra.mxu0 %v2142
        %2684 = vmatpush.bf16.msra.mxu0 %v2141
        %2685 = vmatmul.bf16.gmra.mxu0 %v545
        %v2686 = vpop.f32.mrf.mxu0
        %v2687 = vadd.f32 %v2673, %v2686
        %v2688 = vpop.f32.mrf.mxu0
        %v2689 = vadd.f32 %v2675, %v2688
        %2690 = vdwg.mxu0
        %2691 = vmatpush.bf16.msra.mxu0 %v2156
        %2692 = vmatpush.bf16.msra.mxu0 %v2155
        %2693 = vmatpush.bf16.msra.mxu0 %v2154
        %2694 = vmatpush.bf16.msra.mxu0 %v2153
        %2695 = vmatpush.bf16.msra.mxu0 %v2152
        %2696 = vmatpush.bf16.msra.mxu0 %v2151
        %2697 = vmatpush.bf16.msra.mxu0 %v2150
        %2698 = vmatpush.bf16.msra.mxu0 %v2149
        %2699 = vmatmul.bf16.gmra.mxu0 %v546
        %v2700 = vpop.f32.mrf.mxu0
        %v2701 = vadd.f32 %v2687, %v2700
        %v2702 = vpop.f32.mrf.mxu0
        %v2703 = vadd.f32 %v2689, %v2702
        %2704 = vdwg.mxu0
        %2705 = vmatpush.bf16.msra.mxu0 %v2164
        %2706 = vmatpush.bf16.msra.mxu0 %v2163
        %2707 = vmatpush.bf16.msra.mxu0 %v2162
        %2708 = vmatpush.bf16.msra.mxu0 %v2161
        %2709 = vmatpush.bf16.msra.mxu0 %v2160
        %2710 = vmatpush.bf16.msra.mxu0 %v2159
        %2711 = vmatpush.bf16.msra.mxu0 %v2158
        %2712 = vmatpush.bf16.msra.mxu0 %v2157
        %2713 = vmatmul.bf16.gmra.mxu0 %v547
        %v2714 = vpop.f32.mrf.mxu0
        %v2715 = vadd.f32 %v2701, %v2714
        %v2716 = vpop.f32.mrf.mxu0
        %v2717 = vadd.f32 %v2703, %v2716
        %2718 = vdwg.mxu0
        %2719 = vmatpush.bf16.msra.mxu0 %v2172
        %2720 = vmatpush.bf16.msra.mxu0 %v2171
        %2721 = vmatpush.bf16.msra.mxu0 %v2170
        %2722 = vmatpush.bf16.msra.mxu0 %v2169
        %2723 = vmatpush.bf16.msra.mxu0 %v2168
        %2724 = vmatpush.bf16.msra.mxu0 %v2167
        %2725 = vmatpush.bf16.msra.mxu0 %v2166
        %2726 = vmatpush.bf16.msra.mxu0 %v2165
        %2727 = vmatmul.bf16.gmra.mxu0 %v548
        %v2728 = vpop.f32.mrf.mxu0
        %v2729 = vadd.f32 %v2715, %v2728
        %v2730 = vpop.f32.mrf.mxu0
        %v2731 = vadd.f32 %v2717, %v2730
        %2732 = vdwg.mxu0
        %2733 = vmatpush.bf16.msra.mxu0 %v2180
        %2734 = vmatpush.bf16.msra.mxu0 %v2179
        %2735 = vmatpush.bf16.msra.mxu0 %v2178
        %2736 = vmatpush.bf16.msra.mxu0 %v2177
        %2737 = vmatpush.bf16.msra.mxu0 %v2176
        %2738 = vmatpush.bf16.msra.mxu0 %v2175
        %2739 = vmatpush.bf16.msra.mxu0 %v2174
        %2740 = vmatpush.bf16.msra.mxu0 %v2173
        %2741 = vmatmul.bf16.gmra.mxu0 %v549
        %v2742 = vpop.f32.mrf.mxu0
        %v2743 = vadd.f32 %v2729, %v2742
        %v2744 = vpop.f32.mrf.mxu0
        %v2745 = vadd.f32 %v2731, %v2744
        %2746 = vdwg.mxu0
        %2747 = vmatpush.bf16.msra.mxu0 %v2188
        %2748 = vmatpush.bf16.msra.mxu0 %v2187
        %2749 = vmatpush.bf16.msra.mxu0 %v2186
        %2750 = vmatpush.bf16.msra.mxu0 %v2185
        %2751 = vmatpush.bf16.msra.mxu0 %v2184
        %2752 = vmatpush.bf16.msra.mxu0 %v2183
        %2753 = vmatpush.bf16.msra.mxu0 %v2182
        %2754 = vmatpush.bf16.msra.mxu0 %v2181
        %2755 = vmatmul.bf16.gmra.mxu0 %v550
        %v2756 = vpop.f32.mrf.mxu0
        %v2757 = vadd.f32 %v2743, %v2756
        %v2758 = vpop.f32.mrf.mxu0
        %v2759 = vadd.f32 %v2745, %v2758
        %2760 = vdwg.mxu0
        %2761 = vmatpush.bf16.msra.mxu0 %v2196
        %2762 = vmatpush.bf16.msra.mxu0 %v2195
        %2763 = vmatpush.bf16.msra.mxu0 %v2194
        %2764 = vmatpush.bf16.msra.mxu0 %v2193
        %2765 = vmatpush.bf16.msra.mxu0 %v2192
        %2766 = vmatpush.bf16.msra.mxu0 %v2191
        %2767 = vmatpush.bf16.msra.mxu0 %v2190
        %2768 = vmatpush.bf16.msra.mxu0 %v2189
        %2769 = vmatmul.bf16.gmra.mxu0 %v551
        %v2770 = vpop.f32.mrf.mxu0
        %v2771 = vadd.f32 %v2757, %v2770
        %v2772 = vpop.f32.mrf.mxu0
        %v2773 = vadd.f32 %v2759, %v2772
        %2774 = vdwg.mxu0
        %2775 = vmatpush.bf16.msra.mxu0 %v2204
        %2776 = vmatpush.bf16.msra.mxu0 %v2203
        %2777 = vmatpush.bf16.msra.mxu0 %v2202
        %2778 = vmatpush.bf16.msra.mxu0 %v2201
        %2779 = vmatpush.bf16.msra.mxu0 %v2200
        %2780 = vmatpush.bf16.msra.mxu0 %v2199
        %2781 = vmatpush.bf16.msra.mxu0 %v2198
        %2782 = vmatpush.bf16.msra.mxu0 %v2197
        %2783 = vmatmul.bf16.gmra.mxu0 %v552
        %v2784 = vpop.f32.mrf.mxu0
        %v2785 = vadd.f32 %v2771, %v2784
        %v2786 = vpop.f32.mrf.mxu0
        %v2787 = vadd.f32 %v2773, %v2786
        %2788 = vdwg.mxu0
        %2789 = vmatpush.bf16.msra.mxu0 %v2212
        %2790 = vmatpush.bf16.msra.mxu0 %v2211
        %2791 = vmatpush.bf16.msra.mxu0 %v2210
        %2792 = vmatpush.bf16.msra.mxu0 %v2209
        %2793 = vmatpush.bf16.msra.mxu0 %v2208
        %2794 = vmatpush.bf16.msra.mxu0 %v2207
        %2795 = vmatpush.bf16.msra.mxu0 %v2206
        %2796 = vmatpush.bf16.msra.mxu0 %v2205
        %2797 = vmatmul.bf16.gmra.mxu0 %v553
        %v2798 = vpop.f32.mrf.mxu0
        %v2799 = vadd.f32 %v2785, %v2798
        %v2800 = vpop.f32.mrf.mxu0
        %v2801 = vadd.f32 %v2787, %v2800
        %2802 = vdwg.mxu0
        %2803 = vmatpush.bf16.msra.mxu0 %v2220
        %2804 = vmatpush.bf16.msra.mxu0 %v2219
        %2805 = vmatpush.bf16.msra.mxu0 %v2218
        %2806 = vmatpush.bf16.msra.mxu0 %v2217
        %2807 = vmatpush.bf16.msra.mxu0 %v2216
        %2808 = vmatpush.bf16.msra.mxu0 %v2215
        %2809 = vmatpush.bf16.msra.mxu0 %v2214
        %2810 = vmatpush.bf16.msra.mxu0 %v2213
        %2811 = vmatmul.bf16.gmra.mxu0 %v554
        %v2812 = vpop.f32.mrf.mxu0
        %v2813 = vadd.f32 %v2799, %v2812
        %v2814 = vpop.f32.mrf.mxu0
        %v2815 = vadd.f32 %v2801, %v2814
        %2816 = vdwg.mxu0
        %2817 = vmatpush.bf16.msra.mxu0 %v2228
        %2818 = vmatpush.bf16.msra.mxu0 %v2227
        %2819 = vmatpush.bf16.msra.mxu0 %v2226
        %2820 = vmatpush.bf16.msra.mxu0 %v2225
        %2821 = vmatpush.bf16.msra.mxu0 %v2224
        %2822 = vmatpush.bf16.msra.mxu0 %v2223
        %2823 = vmatpush.bf16.msra.mxu0 %v2222
        %2824 = vmatpush.bf16.msra.mxu0 %v2221
        %2825 = vmatmul.bf16.gmra.mxu0 %v555
        %v2826 = vpop.f32.mrf.mxu0
        %v2827 = vadd.f32 %v2813, %v2826
        %v2828 = vpop.f32.mrf.mxu0
        %v2829 = vadd.f32 %v2815, %v2828
        %2830 = vdwg.mxu0
        %2831 = vmatpush.bf16.msra.mxu0 %v2236
        %2832 = vmatpush.bf16.msra.mxu0 %v2235
        %2833 = vmatpush.bf16.msra.mxu0 %v2234
        %2834 = vmatpush.bf16.msra.mxu0 %v2233
        %2835 = vmatpush.bf16.msra.mxu0 %v2232
        %2836 = vmatpush.bf16.msra.mxu0 %v2231
        %2837 = vmatpush.bf16.msra.mxu0 %v2230
        %2838 = vmatpush.bf16.msra.mxu0 %v2229
        %2839 = vmatmul.bf16.gmra.mxu0 %v556
        %v2840 = vpop.f32.mrf.mxu0
        %v2841 = vadd.f32 %v2827, %v2840
        %v2842 = vpop.f32.mrf.mxu0
        %v2843 = vadd.f32 %v2829, %v2842
        %2844 = vdwg.mxu0
        %2845 = vmatpush.bf16.msra.mxu0 %v2244
        %2846 = vmatpush.bf16.msra.mxu0 %v2243
        %2847 = vmatpush.bf16.msra.mxu0 %v2242
        %2848 = vmatpush.bf16.msra.mxu0 %v2241
        %2849 = vmatpush.bf16.msra.mxu0 %v2240
        %2850 = vmatpush.bf16.msra.mxu0 %v2239
        %2851 = vmatpush.bf16.msra.mxu0 %v2238
        %2852 = vmatpush.bf16.msra.mxu0 %v2237
        %2853 = vmatmul.bf16.gmra.mxu0 %v557
        %v2854 = vpop.f32.mrf.mxu0
        %v2855 = vadd.f32 %v2841, %v2854
        %v2856 = vpop.f32.mrf.mxu0
        %v2857 = vadd.f32 %v2843, %v2856
        %2858 = vdwg.mxu0
        %2859 = vmatpush.bf16.msra.mxu0 %v2252
        %2860 = vmatpush.bf16.msra.mxu0 %v2251
        %2861 = vmatpush.bf16.msra.mxu0 %v2250
        %2862 = vmatpush.bf16.msra.mxu0 %v2249
        %2863 = vmatpush.bf16.msra.mxu0 %v2248
        %2864 = vmatpush.bf16.msra.mxu0 %v2247
        %2865 = vmatpush.bf16.msra.mxu0 %v2246
        %2866 = vmatpush.bf16.msra.mxu0 %v2245
        %2867 = vmatmul.bf16.gmra.mxu0 %v558
        %v2868 = vpop.f32.mrf.mxu0
        %v2869 = vadd.f32 %v2855, %v2868
        %v2870 = vpop.f32.mrf.mxu0
        %v2871 = vadd.f32 %v2857, %v2870
        %2872 = vdwg.mxu0
        %2873 = vmatpush.bf16.msra.mxu0 %v2260
        %2874 = vmatpush.bf16.msra.mxu0 %v2259
        %2875 = vmatpush.bf16.msra.mxu0 %v2258
        %2876 = vmatpush.bf16.msra.mxu0 %v2257
        %2877 = vmatpush.bf16.msra.mxu0 %v2256
        %2878 = vmatpush.bf16.msra.mxu0 %v2255
        %2879 = vmatpush.bf16.msra.mxu0 %v2254
        %2880 = vmatpush.bf16.msra.mxu0 %v2253
        %2881 = vmatmul.bf16.gmra.mxu0 %v559
        %v2882 = vpop.f32.mrf.mxu0
        %v2883 = vadd.f32 %v2869, %v2882
        %v2884 = vpop.f32.mrf.mxu0
        %v2885 = vadd.f32 %v2871, %v2884
        %2886 = vdwg.mxu0
        %2887 = vmatpush.bf16.msra.mxu0 %v2268
        %2888 = vmatpush.bf16.msra.mxu0 %v2267
        %2889 = vmatpush.bf16.msra.mxu0 %v2266
        %2890 = vmatpush.bf16.msra.mxu0 %v2265
        %2891 = vmatpush.bf16.msra.mxu0 %v2264
        %2892 = vmatpush.bf16.msra.mxu0 %v2263
        %2893 = vmatpush.bf16.msra.mxu0 %v2262
        %2894 = vmatpush.bf16.msra.mxu0 %v2261
        %2895 = vmatmul.bf16.gmra.mxu0 %v560
        %v2896 = vpop.f32.mrf.mxu0
        %v2897 = vadd.f32 %v2883, %v2896
        %v2898 = vpop.f32.mrf.mxu0
        %v2899 = vadd.f32 %v2885, %v2898
        %2900 = vdwg.mxu0
        %2901 = vmatpush.bf16.msra.mxu0 %v2276
        %2902 = vmatpush.bf16.msra.mxu0 %v2275
        %2903 = vmatpush.bf16.msra.mxu0 %v2274
        %2904 = vmatpush.bf16.msra.mxu0 %v2273
        %2905 = vmatpush.bf16.msra.mxu0 %v2272
        %2906 = vmatpush.bf16.msra.mxu0 %v2271
        %2907 = vmatpush.bf16.msra.mxu0 %v2270
        %2908 = vmatpush.bf16.msra.mxu0 %v2269
        %2909 = vmatmul.bf16.gmra.mxu0 %v561
        %v2910 = vpop.f32.mrf.mxu0
        %v2911 = vadd.f32 %v2897, %v2910
        %v2912 = vpop.f32.mrf.mxu0
        %v2913 = vadd.f32 %v2899, %v2912
        %2914 = vdwg.mxu0
        %2915 = vmatpush.bf16.msra.mxu0 %v2284
        %2916 = vmatpush.bf16.msra.mxu0 %v2283
        %2917 = vmatpush.bf16.msra.mxu0 %v2282
        %2918 = vmatpush.bf16.msra.mxu0 %v2281
        %2919 = vmatpush.bf16.msra.mxu0 %v2280
        %2920 = vmatpush.bf16.msra.mxu0 %v2279
        %2921 = vmatpush.bf16.msra.mxu0 %v2278
        %2922 = vmatpush.bf16.msra.mxu0 %v2277
        %2923 = vmatmul.bf16.gmra.mxu0 %v562
        %v2924 = vpop.f32.mrf.mxu0
        %v2925 = vadd.f32 %v2911, %v2924
        %v2926 = vpop.f32.mrf.mxu0
        %v2927 = vadd.f32 %v2913, %v2926
        %2928 = vdwg.mxu0
        %2929 = vmatpush.bf16.msra.mxu0 %v2292
        %2930 = vmatpush.bf16.msra.mxu0 %v2291
        %2931 = vmatpush.bf16.msra.mxu0 %v2290
        %2932 = vmatpush.bf16.msra.mxu0 %v2289
        %2933 = vmatpush.bf16.msra.mxu0 %v2288
        %2934 = vmatpush.bf16.msra.mxu0 %v2287
        %2935 = vmatpush.bf16.msra.mxu0 %v2286
        %2936 = vmatpush.bf16.msra.mxu0 %v2285
        %2937 = vmatmul.bf16.gmra.mxu0 %v563
        %v2938 = vpop.f32.mrf.mxu0
        %v2939 = vadd.f32 %v2925, %v2938
        %v2940 = vpop.f32.mrf.mxu0
        %v2941 = vadd.f32 %v2927, %v2940
        %2942 = vdwg.mxu0
        %2943 = vmatpush.bf16.msra.mxu0 %v2300
        %2944 = vmatpush.bf16.msra.mxu0 %v2299
        %2945 = vmatpush.bf16.msra.mxu0 %v2298
        %2946 = vmatpush.bf16.msra.mxu0 %v2297
        %2947 = vmatpush.bf16.msra.mxu0 %v2296
        %2948 = vmatpush.bf16.msra.mxu0 %v2295
        %2949 = vmatpush.bf16.msra.mxu0 %v2294
        %2950 = vmatpush.bf16.msra.mxu0 %v2293
        %2951 = vmatmul.bf16.gmra.mxu0 %v564
        %v2952 = vpop.f32.mrf.mxu0
        %v2953 = vadd.f32 %v2939, %v2952
        %v2954 = vpop.f32.mrf.mxu0
        %v2955 = vadd.f32 %v2941, %v2954
        %2956 = vdwg.mxu0
        %2957 = vmatpush.bf16.msra.mxu0 %v2308
        %2958 = vmatpush.bf16.msra.mxu0 %v2307
        %2959 = vmatpush.bf16.msra.mxu0 %v2306
        %2960 = vmatpush.bf16.msra.mxu0 %v2305
        %2961 = vmatpush.bf16.msra.mxu0 %v2304
        %2962 = vmatpush.bf16.msra.mxu0 %v2303
        %2963 = vmatpush.bf16.msra.mxu0 %v2302
        %2964 = vmatpush.bf16.msra.mxu0 %v2301
        %2965 = vmatmul.bf16.gmra.mxu0 %v565
        %v2966 = vpop.f32.mrf.mxu0
        %v2967 = vadd.f32 %v2953, %v2966
        %v2968 = vpop.f32.mrf.mxu0
        %v2969 = vadd.f32 %v2955, %v2968
        %2970 = vdwg.mxu0
        %2971 = vmatpush.bf16.msra.mxu0 %v2316
        %2972 = vmatpush.bf16.msra.mxu0 %v2315
        %2973 = vmatpush.bf16.msra.mxu0 %v2314
        %2974 = vmatpush.bf16.msra.mxu0 %v2313
        %2975 = vmatpush.bf16.msra.mxu0 %v2312
        %2976 = vmatpush.bf16.msra.mxu0 %v2311
        %2977 = vmatpush.bf16.msra.mxu0 %v2310
        %2978 = vmatpush.bf16.msra.mxu0 %v2309
        %2979 = vmatmul.bf16.gmra.mxu0 %v566
        %v2980 = vpop.f32.mrf.mxu0
        %v2981 = vadd.f32 %v2967, %v2980
        %v2982 = vpop.f32.mrf.mxu0
        %v2983 = vadd.f32 %v2969, %v2982
        %2984 = vdwg.mxu0
        %2985 = vmatpush.bf16.msra.mxu0 %v2324
        %2986 = vmatpush.bf16.msra.mxu0 %v2323
        %2987 = vmatpush.bf16.msra.mxu0 %v2322
        %2988 = vmatpush.bf16.msra.mxu0 %v2321
        %2989 = vmatpush.bf16.msra.mxu0 %v2320
        %2990 = vmatpush.bf16.msra.mxu0 %v2319
        %2991 = vmatpush.bf16.msra.mxu0 %v2318
        %2992 = vmatpush.bf16.msra.mxu0 %v2317
        %2993 = vmatmul.bf16.gmra.mxu0 %v567
        %v2994 = vpop.f32.mrf.mxu0
        %v2995 = vadd.f32 %v2981, %v2994
        %v2996 = vpop.f32.mrf.mxu0
        %v2997 = vadd.f32 %v2983, %v2996
        %2998 = vdwg.mxu0
        %2999 = vmatpush.bf16.msra.mxu0 %v2332
        %3000 = vmatpush.bf16.msra.mxu0 %v2331
        %3001 = vmatpush.bf16.msra.mxu0 %v2330
        %3002 = vmatpush.bf16.msra.mxu0 %v2329
        %3003 = vmatpush.bf16.msra.mxu0 %v2328
        %3004 = vmatpush.bf16.msra.mxu0 %v2327
        %3005 = vmatpush.bf16.msra.mxu0 %v2326
        %3006 = vmatpush.bf16.msra.mxu0 %v2325
        %3007 = vmatmul.bf16.gmra.mxu0 %v568
        %v3008 = vpop.f32.mrf.mxu0
        %v3009 = vadd.f32 %v2995, %v3008
        %v3010 = vpop.f32.mrf.mxu0
        %v3011 = vadd.f32 %v2997, %v3010
        %3012 = vdwg.mxu0
        %3013 = vmatpush.bf16.msra.mxu0 %v2340
        %3014 = vmatpush.bf16.msra.mxu0 %v2339
        %3015 = vmatpush.bf16.msra.mxu0 %v2338
        %3016 = vmatpush.bf16.msra.mxu0 %v2337
        %3017 = vmatpush.bf16.msra.mxu0 %v2336
        %3018 = vmatpush.bf16.msra.mxu0 %v2335
        %3019 = vmatpush.bf16.msra.mxu0 %v2334
        %3020 = vmatpush.bf16.msra.mxu0 %v2333
        %3021 = vmatmul.bf16.gmra.mxu0 %v569
        %v3022 = vpop.f32.mrf.mxu0
        %v3023 = vadd.f32 %v3009, %v3022
        %v3024 = vpop.f32.mrf.mxu0
        %v3025 = vadd.f32 %v3011, %v3024
        %3026 = vdwg.mxu0
        %3027 = vmatpush.bf16.msra.mxu0 %v2348
        %3028 = vmatpush.bf16.msra.mxu0 %v2347
        %3029 = vmatpush.bf16.msra.mxu0 %v2346
        %3030 = vmatpush.bf16.msra.mxu0 %v2345
        %3031 = vmatpush.bf16.msra.mxu0 %v2344
        %3032 = vmatpush.bf16.msra.mxu0 %v2343
        %3033 = vmatpush.bf16.msra.mxu0 %v2342
        %3034 = vmatpush.bf16.msra.mxu0 %v2341
        %3035 = vmatmul.bf16.gmra.mxu0 %v570
        %v3036 = vpop.f32.mrf.mxu0
        %v3037 = vadd.f32 %v3023, %v3036
        %v3038 = vpop.f32.mrf.mxu0
        %v3039 = vadd.f32 %v3025, %v3038
        %3040 = vdwg.mxu0
        %3041 = vmatpush.bf16.msra.mxu0 %v2356
        %3042 = vmatpush.bf16.msra.mxu0 %v2355
        %3043 = vmatpush.bf16.msra.mxu0 %v2354
        %3044 = vmatpush.bf16.msra.mxu0 %v2353
        %3045 = vmatpush.bf16.msra.mxu0 %v2352
        %3046 = vmatpush.bf16.msra.mxu0 %v2351
        %3047 = vmatpush.bf16.msra.mxu0 %v2350
        %3048 = vmatpush.bf16.msra.mxu0 %v2349
        %3049 = vmatmul.bf16.gmra.mxu0 %v571
        %v3050 = vpop.f32.mrf.mxu0
        %v3051 = vadd.f32 %v3037, %v3050
        %v3052 = vpop.f32.mrf.mxu0
        %v3053 = vadd.f32 %v3039, %v3052
        %3054 = vdwg.mxu0
        %3055 = vmatpush.bf16.msra.mxu0 %v2364
        %3056 = vmatpush.bf16.msra.mxu0 %v2363
        %3057 = vmatpush.bf16.msra.mxu0 %v2362
        %3058 = vmatpush.bf16.msra.mxu0 %v2361
        %3059 = vmatpush.bf16.msra.mxu0 %v2360
        %3060 = vmatpush.bf16.msra.mxu0 %v2359
        %3061 = vmatpush.bf16.msra.mxu0 %v2358
        %3062 = vmatpush.bf16.msra.mxu0 %v2357
        %3063 = vmatmul.bf16.gmra.mxu0 %v572
        %v3064 = vpop.f32.mrf.mxu0
        %v3065 = vadd.f32 %v3051, %v3064
        %v3066 = vpop.f32.mrf.mxu0
        %v3067 = vadd.f32 %v3053, %v3066
        %3068 = vdwg.mxu0
        %v3069 = vadd.f32 %v475, %v3065
        %v3070 = vadd.f32 %v476, %v3067
        %3071 = vst [vmem:[#allocation2] sm:$0xff] %v3069
        %3072 = vst [vmem:[#allocation2 + $0x8] sm:$0xff] %v3070
        %p3073 = scmp.eq.s32.totalorder %s25, 1
        // Predicated region
        $region76: #{dsd_fc_forward.1} parent=66 // pred_check
          %p3074 = pneg %p3073
        $region77: #{dsd_fc_forward.1} parent=66 // pred_check_branch
          %3076 = sbr.rel (%p3074) target = $region79
        $region78: #{dsd_fc_forward.1} parent=66 // pred_region
          %v3077 = vld [vmem:[#allocation2] sm:$0xff]
          %v3078 = vld [vmem:[#allocation2 + $0x8] sm:$0xff]
          %v3079 = vld [vmem:[%s2] sm:$0x1]
          %v3081 = vperm.slane %v3079, 0
          %v3083 = vadd.f32 %v3077, %v3081
          %v3084 = vadd.f32 %v3078, %v3081
          %v3085 = vmax.f32 %v3083, 0.0
          %v3086 = vmax.f32 %v3084, 0.0
          %v3087 = vld [vmem:[%s3] sm:$0xff]
          %v3088 = vld [vmem:[%s3 + $0x8] sm:$0xff]
          %v3089 = vld [vmem:[%s3 + $0x10] sm:$0xff]
          %v3090 = vld [vmem:[%s3 + $0x18] sm:$0xff]
          %v3091 = vld [vmem:[%s3 + $0x20] sm:$0xff]
          %v3092 = vld [vmem:[%s3 + $0x28] sm:$0xff]
          %v3093 = vld [vmem:[%s3 + $0x30] sm:$0xff]
          %v3094 = vld [vmem:[%s3 + $0x38] sm:$0xff]
          %v3095 = vld [vmem:[%s3 + $0x40] sm:$0xff]
          %v3096 = vld [vmem:[%s3 + $0x48] sm:$0xff]
          %v3097 = vld [vmem:[%s3 + $0x50] sm:$0xff]
          %v3098 = vld [vmem:[%s3 + $0x58] sm:$0xff]
          %v3099 = vld [vmem:[%s3 + $0x60] sm:$0xff]
          %v3100 = vld [vmem:[%s3 + $0x68] sm:$0xff]
          %v3101 = vld [vmem:[%s3 + $0x70] sm:$0xff]
          %v3102 = vld [vmem:[%s3 + $0x78] sm:$0xff]
          %v3103 = vld [vmem:[%s4] sm:$0x1]
          %v3105 = vperm.slane %v3103, 0
          %3107 = vmatpush.msra.mxu0 %v3102
          %3108 = vmatpush.msra.mxu0 %v3101
          %3109 = vmatpush.msra.mxu0 %v3100
          %3110 = vmatpush.msra.mxu0 %v3099
          %3111 = vmatpush.msra.mxu0 %v3098
          %3112 = vmatpush.msra.mxu0 %v3097
          %3113 = vmatpush.msra.mxu0 %v3096
          %3114 = vmatpush.msra.mxu0 %v3095
          %3115 = vmatpush.msra.mxu0 %v3094
          %3116 = vmatpush.msra.mxu0 %v3093
          %3117 = vmatpush.msra.mxu0 %v3092
          %3118 = vmatpush.msra.mxu0 %v3091
          %3119 = vmatpush.msra.mxu0 %v3090
          %3120 = vmatpush.msra.mxu0 %v3089
          %3121 = vmatpush.msra.mxu0 %v3088
          %3122 = vmatpush.msra.mxu0 %v3087
          %3123 = vmatmul.f32.gmra.mxu0 %v3085
          %v3124 = vpop.f32.mrf.mxu0
          %v3125 = vadd.f32 %v3105, %v3124
          %3126 = vmatmul.f32.gmra.mxu0 %v3086
          %v3127 = vpop.f32.mrf.mxu0
          %v3128 = vadd.f32 %v3105, %v3127
          %3129 = vdwg.mxu0
          %v3130 = vmax.f32 %v3125, 0.0
          %v3131 = vmax.f32 %v3128, 0.0
          %v3132 = vld [vmem:[%s5] sm:$0x1]
          %v3134 = vperm.slane %v3132, 0
          %v3136 = vmul.f32 %v3130, %v3134
          %v3137 = vmul.f32 %v3131, %v3134
          %vm3138 = vcmask 261120
          %v3139 = vsel %vm3138, %v3136, 0.0
          %3140 = vadd.xlane.f32.xlu0 %v3139
          %v3141 = vpop.xlane.xlu0 %3140
          %v3142 = vsel %vm3138, %v3137, 0.0
          %3143 = vadd.xlane.f32.xlu0 %v3142
          %v3144 = vpop.xlane.xlu0 %3143
          %v3145 = vld [vmem:[#allocation3] sm:$0x1]
          %v3147 = vperm.slane %v3145, 0
          %v3149 = vadd.f32 %v3141, %v3147
          %v3150 = vadd.f32 %v3144, %v3147
          %vm3151 = vcmask 7168
          %3152 = vst.msk [vmem:[%s467] sm:$0xff] %vm3151, %v3149
          %3153 = vst.msk [vmem:[%s467 + $0x8] sm:$0xff] %vm3151, %v3150
        $region79: #{dsd_fc_forward.1} parent=66 // pred_fallthru
          _
        %s3154 = smul.u32 2, %s24
        %p3155 = scmp.lt.s32.totalorder %s3154, 1
        %s3156 = scalar_select %p3155, %s3154, 1
        %s3157 = smul.addr %s3156, 8
        %s3158 = scalar_lea.vmem %s7, %s3157
        // Predicated region
        $region80: #{dsd_fc_forward.1} parent=66 // pred_check
          %p3159 = pneg %p209
        $region81: #{dsd_fc_forward.1} parent=66 // pred_check_branch
          %3161 = sbr.rel (%p3159) target = $region83
        $region82: #{dsd_fc_forward.1} parent=66 // pred_region
          %s3162 = smul.u32 2, %s24
        $region83: #{dsd_fc_forward.1} parent=66 // pred_fallthru
          _
        // Predicated region
        $region84: #{dsd_fc_forward.1} parent=66 // pred_check
          %p3163 = pneg %p209
        $region85: #{dsd_fc_forward.1} parent=66 // pred_check_branch
          %3165 = sbr.rel (%p3163) target = $region87
        $region86: #{dsd_fc_forward.1} parent=66 // pred_region
          %s3166 = smul.u32 2, %s24
          %p3167 = scmp.lt.s32.totalorder %s3166, 1
          %s3168 = scalar_select %p3167, %s3166, 1
          %s3169 = smul.addr %s3168, 8
          %s3170 = scalar_lea.vmem %s7, %s3169
        $region87: #{dsd_fc_forward.1} parent=66 // pred_fallthru
          _
      $region67: #{dsd_fc_forward.1} parent=5 // pred_fallthru
        _
      %p3171 = scmp.le.s32.totalorder 2, %s15
      // Predicated region
      $region88: #{dsd_fc_forward.1} parent=5 // pred_check
        %p3172 = pneg %p3171
      $region89: #{dsd_fc_forward.1} parent=5 // pred_check_branch
        %3174 = sbr.rel (%p3172) target = $region91
      $region90: #{dsd_fc_forward.1} parent=5 // pred_region
        %s3175 = ssub.s32 %s15, 2
      $region91: #{dsd_fc_forward.1} parent=5 // pred_fallthru
        _
    $region6: #{dsd_fc_forward.1} parent=1 // loop_footer
      %s19 = sadd.s32 1, %s15
    $region7: #{dsd_fc_forward.1} parent=1 // loop_footer_branch
      %14 = sbr.rel target = $region3
    $region8: #{dsd_fc_forward.1} parent=1 // loop_exit
      _

</llo_original>
